<compile_context>
chip_gen: v6e
topology: v6e:2x2x1
jax: 0.10.0
libtpu: 0.0.40
codegen_flags: <defaults>
</compile_context>

<pallas_src>
import functools

import jax
import jax.numpy as jnp
import numpy as np
from jax.experimental import pallas as pl
from jax.experimental.pallas import tpu as pltpu


def _sum_all(x):
    """Sum of every element, keepdims form; lane (last) axis reduced last."""
    s = x
    for ax in range(x.ndim):          # ascending: leading dims, sublane, lane last
        s = jnp.sum(s, axis=ax, keepdims=True)
    return s


def _myarc_loss_kernel(psf_ref, r_ref, out_ref, tgt_ref, msi_ref,
                       tgt_o_ref, msi_o_ref, hsi_o_ref, diff_ref,
                       *, sf, kh, kw, pad, pp, ho2, wo2, use_mxu):
    out_blk = out_ref[0]              # (Hin, Win, C)  channels on lanes
    tgt_blk = tgt_ref[0]
    msi_blk = msi_ref[0]              # (Hin, Win, M)

    c = out_blk.shape[-1]
    m = msi_blk.shape[-1]

    # ------------- diff, written once (reused by target-L1 and the PSF conv) -
    diff = out_blk - tgt_blk
    diff_ref[...] = diff

    # ------------- target L1 partial: sum |output - target| ------------------
    tgt_o_ref[...] = _sum_all(jnp.abs(diff)).reshape(1, 1, 1)

    # ------------- MSI L1 partial: sum |tensordot(output, R) - MSI| ----------
    r = r_ref[...]                    # (M, C)
    if use_mxu:
        hw = out_blk.shape[0] * out_blk.shape[1]
        rtz = jax.lax.dot_general(
            out_blk.reshape(hw, c), r,
            dimension_numbers=(((1,), (1,)), ((), ())),
            preferred_element_type=jnp.float32)                 # (HW, M)
        msi_abs = jnp.abs(rtz - msi_blk.reshape(hw, m))
        msi_o_ref[...] = _sum_all(msi_abs).reshape(1, 1, 1)
    else:
        # Small M: VPU broadcast-multiply + per-pixel lane reduce, MXU stays idle.
        acc = None
        for mm in range(m):
            rtz_m = jnp.sum(out_blk * r[mm:mm + 1, :], axis=2, keepdims=True)
            d = jnp.abs(rtz_m - msi_blk[:, :, mm:mm + 1])
            acc = d if acc is None else acc + d
        msi_o_ref[...] = _sum_all(acc).reshape(1, 1, 1)

    # ------------- HSI L1 partial: strided depthwise PSF conv on diff --------
    # Cropped conv output rows/cols oy, ox in [1, Ho-2]; the input row/col for
    # tap (i, j) is sf*oy + i - pad (+pp wrapper padding when pad > sf).
    h0 = sf - pad + pp
    w0 = sf - pad + pp
    conv_acc = jnp.zeros((ho2, wo2, c), jnp.float32)
    for i in range(kh):
        for j in range(kw):
            win = diff_ref[pl.ds(h0 + i, ho2, sf), pl.ds(w0 + j, wo2, sf), :]
            conv_acc = conv_acc + psf_ref[i, j] * win
    hsi_o_ref[...] = _sum_all(jnp.abs(conv_acc)).reshape(1, 1, 1)


def myarc_loss(output, target, msi, R, psf, sf):
    """Pallas-TPU equivalent of MyarcLoss(R, PSF).forward(output, target, MSI, sf).

    output, target : (B, C, H, W) float32   (NCHW, PyTorch convention)
    msi            : (B, M, H, W) float32
    R              : (M, C) float32
    psf            : (kh, kw) float32
    sf             : python int, conv stride (downsampling factor)
    """
    B, C, H, W = output.shape
    M = R.shape[0]
    kh, kw = psf.shape
    pad = (kh - 1) // 2                     # torch: int((w1 - 1) / 2), w1 = PSF.shape[0]
    Hp, Wp = H + 2 * pad, W + 2 * pad
    Ho = (Hp - kh) // sf + 1
    Wo = (Wp - kw) // sf + 1
    assert Ho >= 3 and Wo >= 3, "need at least one pixel of border for the [1:-1] crop"
    ho2, wo2 = Ho - 2, Wo - 2

    # Only pad when the cropped conv can actually reach the zero border
    # (pad > sf).  For the common case (e.g. 3x3 PSF, sf >= 1... sf >= pad)
    # no padding copy is made at all.
    pp = max(0, pad - sf)

    to_nhwc = lambda x: jnp.transpose(x, (0, 2, 3, 1)).astype(jnp.float32)
    out_nhwc = to_nhwc(output)
    tgt_nhwc = to_nhwc(target)
    msi_nhwc = to_nhwc(msi)
    if pp:
        sp = ((0, 0), (pp, pp), (pp, pp), (0, 0))
        out_nhwc = jnp.pad(out_nhwc, sp)
        tgt_nhwc = jnp.pad(tgt_nhwc, sp)
        msi_nhwc = jnp.pad(msi_nhwc, sp)    # zeros cancel in the L1 sums
    Hin, Win = H + 2 * pp, W + 2 * pp

    use_mxu = (C >= 128) or (M > 16)        # tiny (.,C)x(C,M) stays off the MXU

    kernel = functools.partial(_myarc_loss_kernel, sf=sf, kh=kh, kw=kw,
                               pad=pad, pp=pp, ho2=ho2, wo2=wo2, use_mxu=use_mxu)

    # Grid over batch: each step streams one image block of every tensor
    # exactly once (pipelined HBM->VMEM), emits three scalar partial sums.
    # NOTE: for very large single images an H-tiled variant with conv halos
    # would be needed; training-patch-sized hyperspectral inputs fit per-image.
    in_specs = [
        pl.BlockSpec(memory_space=pltpu.MemorySpace.SMEM),                # PSF taps
        pl.BlockSpec((M, C), lambda b: (0, 0)),                           # R
        pl.BlockSpec((1, Hin, Win, C), lambda b: (b, 0, 0, 0)),           # output
        pl.BlockSpec((1, Hin, Win, C), lambda b: (b, 0, 0, 0)),           # target
        pl.BlockSpec((1, Hin, Win, M), lambda b: (b, 0, 0, 0)),           # MSI
    ]
    out_specs = (
        pl.BlockSpec((1, 1, 1), lambda b: (b, 0, 0)),
        pl.BlockSpec((1, 1, 1), lambda b: (b, 0, 0)),
        pl.BlockSpec((1, 1, 1), lambda b: (b, 0, 0)),
    )
    out_shape = (jax.ShapeDtypeStruct((B, 1, 1), jnp.float32),) * 3

    tgt_p, msi_p, hsi_p = pl.pallas_call(
        kernel,
        grid=(B,),
        in_specs=in_specs,
        out_specs=out_specs,
        out_shape=out_shape,
        scratch_shapes=[pltpu.VMEM((Hin, Win, C), jnp.float32)],          # diff
        compiler_params=pltpu.CompilerParams(
            dimension_semantics=("parallel",),
            vmem_limit_bytes=48 * 1024 * 1024),
    )(psf.astype(jnp.float32), R.astype(jnp.float32),
      out_nhwc, tgt_nhwc, msi_nhwc)

    # Combine per-batch partials with the true element counts (means).
    tgt_loss = jnp.sum(tgt_p) / float(B * H * W * C)
    msi_loss = jnp.sum(msi_p) / float(B * H * W * M)
    hsi_loss = jnp.sum(hsi_p) / float(B * C * ho2 * wo2)
    return msi_loss + tgt_loss + 0.1 * hsi_loss


def _reference_loss(output, target, msi, R, psf, sf):
    """Pure-JAX mirror of the PyTorch forward (for correctness checking)."""
    B, C, H, W = output.shape
    kh, kw = psf.shape
    pad = (kh - 1) // 2
    weight = jnp.broadcast_to(psf[None, None, :, :], (C, 1, kh, kw))
    conv = lambda x: jax.lax.conv_general_dilated(
        x, weight, window_strides=(sf, sf), padding=[(pad, pad), (pad, pad)],
        dimension_numbers=('NCHW', 'OIHW', 'NCHW'), feature_group_count=C,
        precision=jax.lax.Precision.HIGHEST)
    outs = conv(output)
    target_hsi = conv(target)
    rtz = jnp.tensordot(output, R, axes=([1], [1]),
                        precision=jax.lax.Precision.HIGHEST)   # (B, H, W, M)
    rtz = jnp.transpose(rtz, (0, 3, 1, 2))
    msi_loss = jnp.mean(jnp.abs(rtz - msi))
    tgt_loss = jnp.mean(jnp.abs(output - target))
    hsi_loss = jnp.mean(jnp.abs(outs[:, :, 1:-1, 1:-1] - target_hsi[:, :, 1:-1, 1:-1]))
    return msi_loss + tgt_loss + 0.1 * hsi_loss


if __name__ == "__main__":
    key = jax.random.PRNGKey(0)
    k1, k2, k3, k4, k5 = jax.random.split(key, 5)

    # Small synthetic shapes consistent with the module's forward:
    B, C, H, W = 2, 8, 16, 16     # HR hyperspectral: batch 2, 8 bands, 16x16
    M = 4                         # multispectral bands (rows of R)
    kh = kw = 3                   # PSF size
    sf = 2                        # conv stride / downsampling factor

    output = jax.random.normal(k1, (B, C, H, W), jnp.float32)
    target = jax.random.normal(k2, (B, C, H, W), jnp.float32)
    msi = jax.random.normal(k3, (B, M, H, W), jnp.float32)
    R = jax.random.uniform(k4, (M, C), jnp.float32)        # spectral response matrix
    psf = jax.random.uniform(k5, (kh, kw), jnp.float32)
    psf = psf / jnp.sum(psf)                                # normalized blur kernel

    loss_fn = jax.jit(myarc_loss, static_argnums=(5,))
    loss = jax.block_until_ready(loss_fn(output, target, msi, R, psf, sf))

    ref = jax.block_until_ready(_reference_loss(output, target, msi, R, psf, sf))
    np.testing.assert_allclose(np.asarray(loss), np.asarray(ref), rtol=5e-3, atol=1e-3)

    print("KERNEL_OK")
</pallas_src>

<mosaic_0001>
module attributes {stable_mosaic.version = 11 : i64} {
  func.func @_myarc_loss_kernel(%arg0: i32, %arg1: memref<3x3xf32, #tpu.memory_space<smem>>, %arg2: memref<4x8xf32, #tpu.memory_space<vmem>>, %arg3: memref<1x16x16x8xf32, #tpu.memory_space<vmem>>, %arg4: memref<1x16x16x8xf32, #tpu.memory_space<vmem>>, %arg5: memref<1x16x16x4xf32, #tpu.memory_space<vmem>>, %arg6: memref<1x1x1xf32, #tpu.memory_space<vmem>>, %arg7: memref<1x1x1xf32, #tpu.memory_space<vmem>>, %arg8: memref<1x1x1xf32, #tpu.memory_space<vmem>>, %arg9: memref<16x16x8xf32, #tpu.memory_space<vmem>>) attributes {dimension_semantics = [#tpu.dimension_semantics<parallel>], iteration_bounds = array<i64: 2>, scalar_prefetch = 0 : i64, scratch_operands = 1 : i64, tpu.core_type = #tpu.core_type<tc>, window_params = [{transform_indices = @transform_0, window_bounds = array<i64: 3, 3>}, {pipeline_mode = #tpu.pipeline_mode<synchronous>, transform_indices = @transform_1, window_bounds = array<i64: 4, 8>}, {transform_indices = @transform_2, window_bounds = array<i64: 1, 16, 16, 8>}, {transform_indices = @transform_3, window_bounds = array<i64: 1, 16, 16, 8>}, {transform_indices = @transform_4, window_bounds = array<i64: 1, 16, 16, 4>}, {transform_indices = @transform_5, window_bounds = array<i64: 1, 1, 1>}, {transform_indices = @transform_6, window_bounds = array<i64: 1, 1, 1>}, {transform_indices = @transform_7, window_bounds = array<i64: 1, 1, 1>}]} {
    %c0 = arith.constant 0 : index
    %c0_0 = arith.constant 0 : index
    %c0_1 = arith.constant 0 : index
    %c0_2 = arith.constant 0 : index
    %0 = vector.load %arg3[%c0, %c0_0, %c0_1, %c0_2] : memref<1x16x16x8xf32, #tpu.memory_space<vmem>>, vector<1x16x16x8xf32>
    %1 = vector.shape_cast %0 : vector<1x16x16x8xf32> to vector<16x16x8xf32>
    %c0_3 = arith.constant 0 : index
    %c0_4 = arith.constant 0 : index
    %c0_5 = arith.constant 0 : index
    %c0_6 = arith.constant 0 : index
    %2 = vector.load %arg4[%c0_3, %c0_4, %c0_5, %c0_6] : memref<1x16x16x8xf32, #tpu.memory_space<vmem>>, vector<1x16x16x8xf32>
    %3 = vector.shape_cast %2 : vector<1x16x16x8xf32> to vector<16x16x8xf32>
    %c0_7 = arith.constant 0 : index
    %c0_8 = arith.constant 0 : index
    %c0_9 = arith.constant 0 : index
    %c0_10 = arith.constant 0 : index
    %4 = vector.load %arg5[%c0_7, %c0_8, %c0_9, %c0_10] : memref<1x16x16x4xf32, #tpu.memory_space<vmem>>, vector<1x16x16x4xf32>
    %5 = vector.shape_cast %4 : vector<1x16x16x4xf32> to vector<16x16x4xf32>
    %6 = arith.subf %1, %3 : vector<16x16x8xf32>
    %c0_11 = arith.constant 0 : index
    %c0_12 = arith.constant 0 : index
    %c0_13 = arith.constant 0 : index
    %7 = vector.load %arg9[%c0_11, %c0_12, %c0_13] : memref<16x16x8xf32, #tpu.memory_space<vmem>>, vector<16x16x8xf32>
    tpu.vector_store %arg9[%c0_11, %c0_12, %c0_13], %6 {strides = array<i32>} : memref<16x16x8xf32, #tpu.memory_space<vmem>>, vector<16x16x8xf32>,
    %8 = math.absf %6 : vector<16x16x8xf32>
    %cst = arith.constant dense<0.000000e+00> : vector<16x8xf32>
    %9 = vector.multi_reduction <add>, %8, %cst [0] : vector<16x16x8xf32> to vector<16x8xf32>
    %10 = vector.shape_cast %9 : vector<16x8xf32> to vector<1x16x8xf32>
    %cst_14 = arith.constant dense<0.000000e+00> : vector<1x8xf32>
    %11 = vector.multi_reduction <add>, %10, %cst_14 [1] : vector<1x16x8xf32> to vector<1x8xf32>
    %12 = vector.shape_cast %11 : vector<1x8xf32> to vector<1x1x8xf32>
    %cst_15 = arith.constant dense<0.000000e+00> : vector<1x1xf32>
    %13 = vector.multi_reduction <add>, %12, %cst_15 [2] : vector<1x1x8xf32> to vector<1x1xf32>
    %14 = vector.shape_cast %13 : vector<1x1xf32> to vector<1x1x1xf32>
    %c0_16 = arith.constant 0 : index
    %c0_17 = arith.constant 0 : index
    %c0_18 = arith.constant 0 : index
    %15 = vector.load %arg6[%c0_16, %c0_17, %c0_18] : memref<1x1x1xf32, #tpu.memory_space<vmem>>, vector<1x1x1xf32>
    tpu.vector_store %arg6[%c0_16, %c0_17, %c0_18], %14 {strides = array<i32>} : memref<1x1x1xf32, #tpu.memory_space<vmem>>, vector<1x1x1xf32>,
    %c0_19 = arith.constant 0 : index
    %c0_20 = arith.constant 0 : index
    %16 = vector.load %arg2[%c0_19, %c0_20] : memref<4x8xf32, #tpu.memory_space<vmem>>, vector<4x8xf32>
    %17 = vector.extract_strided_slice %16 {offsets = [0, 0], sizes = [1, 8], strides = [1, 1]} : vector<4x8xf32> to vector<1x8xf32>
    %18 = vector.shape_cast %17 : vector<1x8xf32> to vector<1x1x8xf32>
    %19 = vector.broadcast %18 : vector<1x1x8xf32> to vector<16x16x8xf32>
    %20 = arith.mulf %1, %19 : vector<16x16x8xf32>
    %cst_21 = arith.constant dense<0.000000e+00> : vector<16x16xf32>
    %21 = vector.multi_reduction <add>, %20, %cst_21 [2] : vector<16x16x8xf32> to vector<16x16xf32>
    %22 = vector.shape_cast %21 : vector<16x16xf32> to vector<16x16x1xf32>
    %23 = vector.extract_strided_slice %5 {offsets = [0, 0, 0], sizes = [16, 16, 1], strides = [1, 1, 1]} : vector<16x16x4xf32> to vector<16x16x1xf32>
    %24 = arith.subf %22, %23 : vector<16x16x1xf32>
    %25 = math.absf %24 : vector<16x16x1xf32>
    %26 = vector.extract_strided_slice %16 {offsets = [1, 0], sizes = [1, 8], strides = [1, 1]} : vector<4x8xf32> to vector<1x8xf32>
    %27 = vector.shape_cast %26 : vector<1x8xf32> to vector<1x1x8xf32>
    %28 = vector.broadcast %27 : vector<1x1x8xf32> to vector<16x16x8xf32>
    %29 = arith.mulf %1, %28 : vector<16x16x8xf32>
    %cst_22 = arith.constant dense<0.000000e+00> : vector<16x16xf32>
    %30 = vector.multi_reduction <add>, %29, %cst_22 [2] : vector<16x16x8xf32> to vector<16x16xf32>
    %31 = vector.shape_cast %30 : vector<16x16xf32> to vector<16x16x1xf32>
    %32 = vector.extract_strided_slice %5 {offsets = [0, 0, 1], sizes = [16, 16, 1], strides = [1, 1, 1]} : vector<16x16x4xf32> to vector<16x16x1xf32>
    %33 = arith.subf %31, %32 : vector<16x16x1xf32>
    %34 = math.absf %33 : vector<16x16x1xf32>
    %35 = arith.addf %25, %34 : vector<16x16x1xf32>
    %36 = vector.extract_strided_slice %16 {offsets = [2, 0], sizes = [1, 8], strides = [1, 1]} : vector<4x8xf32> to vector<1x8xf32>
    %37 = vector.shape_cast %36 : vector<1x8xf32> to vector<1x1x8xf32>
    %38 = vector.broadcast %37 : vector<1x1x8xf32> to vector<16x16x8xf32>
    %39 = arith.mulf %1, %38 : vector<16x16x8xf32>
    %cst_23 = arith.constant dense<0.000000e+00> : vector<16x16xf32>
    %40 = vector.multi_reduction <add>, %39, %cst_23 [2] : vector<16x16x8xf32> to vector<16x16xf32>
    %41 = vector.shape_cast %40 : vector<16x16xf32> to vector<16x16x1xf32>
    %42 = vector.extract_strided_slice %5 {offsets = [0, 0, 2], sizes = [16, 16, 1], strides = [1, 1, 1]} : vector<16x16x4xf32> to vector<16x16x1xf32>
    %43 = arith.subf %41, %42 : vector<16x16x1xf32>
    %44 = math.absf %43 : vector<16x16x1xf32>
    %45 = arith.addf %35, %44 : vector<16x16x1xf32>
    %46 = vector.extract_strided_slice %16 {offsets = [3, 0], sizes = [1, 8], strides = [1, 1]} : vector<4x8xf32> to vector<1x8xf32>
    %47 = vector.shape_cast %46 : vector<1x8xf32> to vector<1x1x8xf32>
    %48 = vector.broadcast %47 : vector<1x1x8xf32> to vector<16x16x8xf32>
    %49 = arith.mulf %1, %48 : vector<16x16x8xf32>
    %cst_24 = arith.constant dense<0.000000e+00> : vector<16x16xf32>
    %50 = vector.multi_reduction <add>, %49, %cst_24 [2] : vector<16x16x8xf32> to vector<16x16xf32>
    %51 = vector.shape_cast %50 : vector<16x16xf32> to vector<16x16x1xf32>
    %52 = vector.extract_strided_slice %5 {offsets = [0, 0, 3], sizes = [16, 16, 1], strides = [1, 1, 1]} : vector<16x16x4xf32> to vector<16x16x1xf32>
    %53 = arith.subf %51, %52 : vector<16x16x1xf32>
    %54 = math.absf %53 : vector<16x16x1xf32>
    %55 = arith.addf %45, %54 : vector<16x16x1xf32>
    %cst_25 = arith.constant dense<0.000000e+00> : vector<16x1xf32>
    %56 = vector.multi_reduction <add>, %55, %cst_25 [0] : vector<16x16x1xf32> to vector<16x1xf32>
    %57 = vector.shape_cast %56 : vector<16x1xf32> to vector<1x16x1xf32>
    %cst_26 = arith.constant dense<0.000000e+00> : vector<1x1xf32>
    %58 = vector.multi_reduction <add>, %57, %cst_26 [1] : vector<1x16x1xf32> to vector<1x1xf32>
    %59 = vector.shape_cast %58 : vector<1x1xf32> to vector<1x1x1xf32>
    %cst_27 = arith.constant dense<0.000000e+00> : vector<1x1xf32>
    %60 = vector.multi_reduction <add>, %59, %cst_27 [2] : vector<1x1x1xf32> to vector<1x1xf32>
    %61 = vector.shape_cast %60 : vector<1x1xf32> to vector<1x1x1xf32>
    %c0_28 = arith.constant 0 : index
    %c0_29 = arith.constant 0 : index
    %c0_30 = arith.constant 0 : index
    %62 = vector.load %arg7[%c0_28, %c0_29, %c0_30] : memref<1x1x1xf32, #tpu.memory_space<vmem>>, vector<1x1x1xf32>
    tpu.vector_store %arg7[%c0_28, %c0_29, %c0_30], %61 {strides = array<i32>} : memref<1x1x1xf32, #tpu.memory_space<vmem>>, vector<1x1x1xf32>,
    %cst_31 = arith.constant 0.000000e+00 : f32
    %63 = vector.broadcast %cst_31 : f32 to vector<6x6x8xf32>
    %c1 = arith.constant 1 : index
    %c1_32 = arith.constant 1 : index
    %c0_33 = arith.constant 0 : index
    %64 = tpu.strided_load %arg9[%c1, %c1_32, %c0_33] {strides = array<i32: 2, 2, 1>} : memref<16x16x8xf32, #tpu.memory_space<vmem>>, vector<6x6x8xf32>
    %c0_34 = arith.constant 0 : index
    %c0_35 = arith.constant 0 : index
    %65 = memref.load %arg1[%c0_34, %c0_35] : memref<3x3xf32, #tpu.memory_space<smem>>
    %66 = vector.broadcast %65 : f32 to vector<6x6x8xf32>
    %67 = arith.mulf %66, %64 : vector<6x6x8xf32>
    %68 = arith.addf %63, %67 : vector<6x6x8xf32>
    %c1_36 = arith.constant 1 : index
    %c2 = arith.constant 2 : index
    %c0_37 = arith.constant 0 : index
    %69 = tpu.strided_load %arg9[%c1_36, %c2, %c0_37] {strides = array<i32: 2, 2, 1>} : memref<16x16x8xf32, #tpu.memory_space<vmem>>, vector<6x6x8xf32>
    %c0_38 = arith.constant 0 : index
    %c1_39 = arith.constant 1 : index
    %70 = memref.load %arg1[%c0_38, %c1_39] : memref<3x3xf32, #tpu.memory_space<smem>>
    %71 = vector.broadcast %70 : f32 to vector<6x6x8xf32>
    %72 = arith.mulf %71, %69 : vector<6x6x8xf32>
    %73 = arith.addf %68, %72 : vector<6x6x8xf32>
    %c1_40 = arith.constant 1 : index
    %c3 = arith.constant 3 : index
    %c0_41 = arith.constant 0 : index
    %74 = tpu.strided_load %arg9[%c1_40, %c3, %c0_41] {strides = array<i32: 2, 2, 1>} : memref<16x16x8xf32, #tpu.memory_space<vmem>>, vector<6x6x8xf32>
    %c0_42 = arith.constant 0 : index
    %c2_43 = arith.constant 2 : index
    %75 = memref.load %arg1[%c0_42, %c2_43] : memref<3x3xf32, #tpu.memory_space<smem>>
    %76 = vector.broadcast %75 : f32 to vector<6x6x8xf32>
    %77 = arith.mulf %76, %74 : vector<6x6x8xf32>
    %78 = arith.addf %73, %77 : vector<6x6x8xf32>
    %c2_44 = arith.constant 2 : index
    %c1_45 = arith.constant 1 : index
    %c0_46 = arith.constant 0 : index
    %79 = tpu.strided_load %arg9[%c2_44, %c1_45, %c0_46] {strides = array<i32: 2, 2, 1>} : memref<16x16x8xf32, #tpu.memory_space<vmem>>, vector<6x6x8xf32>
    %c1_47 = arith.constant 1 : index
    %c0_48 = arith.constant 0 : index
    %80 = memref.load %arg1[%c1_47, %c0_48] : memref<3x3xf32, #tpu.memory_space<smem>>
    %81 = vector.broadcast %80 : f32 to vector<6x6x8xf32>
    %82 = arith.mulf %81, %79 : vector<6x6x8xf32>
    %83 = arith.addf %78, %82 : vector<6x6x8xf32>
    %c2_49 = arith.constant 2 : index
    %c2_50 = arith.constant 2 : index
    %c0_51 = arith.constant 0 : index
    %84 = tpu.strided_load %arg9[%c2_49, %c2_50, %c0_51] {strides = array<i32: 2, 2, 1>} : memref<16x16x8xf32, #tpu.memory_space<vmem>>, vector<6x6x8xf32>
    %c1_52 = arith.constant 1 : index
    %c1_53 = arith.constant 1 : index
    %85 = memref.load %arg1[%c1_52, %c1_53] : memref<3x3xf32, #tpu.memory_space<smem>>
    %86 = vector.broadcast %85 : f32 to vector<6x6x8xf32>
    %87 = arith.mulf %86, %84 : vector<6x6x8xf32>
    %88 = arith.addf %83, %87 : vector<6x6x8xf32>
    %c2_54 = arith.constant 2 : index
    %c3_55 = arith.constant 3 : index
    %c0_56 = arith.constant 0 : index
    %89 = tpu.strided_load %arg9[%c2_54, %c3_55, %c0_56] {strides = array<i32: 2, 2, 1>} : memref<16x16x8xf32, #tpu.memory_space<vmem>>, vector<6x6x8xf32>
    %c1_57 = arith.constant 1 : index
    %c2_58 = arith.constant 2 : index
    %90 = memref.load %arg1[%c1_57, %c2_58] : memref<3x3xf32, #tpu.memory_space<smem>>
    %91 = vector.broadcast %90 : f32 to vector<6x6x8xf32>
    %92 = arith.mulf %91, %89 : vector<6x6x8xf32>
    %93 = arith.addf %88, %92 : vector<6x6x8xf32>
    %c3_59 = arith.constant 3 : index
    %c1_60 = arith.constant 1 : index
    %c0_61 = arith.constant 0 : index
    %94 = tpu.strided_load %arg9[%c3_59, %c1_60, %c0_61] {strides = array<i32: 2, 2, 1>} : memref<16x16x8xf32, #tpu.memory_space<vmem>>, vector<6x6x8xf32>
    %c2_62 = arith.constant 2 : index
    %c0_63 = arith.constant 0 : index
    %95 = memref.load %arg1[%c2_62, %c0_63] : memref<3x3xf32, #tpu.memory_space<smem>>
    %96 = vector.broadcast %95 : f32 to vector<6x6x8xf32>
    %97 = arith.mulf %96, %94 : vector<6x6x8xf32>
    %98 = arith.addf %93, %97 : vector<6x6x8xf32>
    %c3_64 = arith.constant 3 : index
    %c2_65 = arith.constant 2 : index
    %c0_66 = arith.constant 0 : index
    %99 = tpu.strided_load %arg9[%c3_64, %c2_65, %c0_66] {strides = array<i32: 2, 2, 1>} : memref<16x16x8xf32, #tpu.memory_space<vmem>>, vector<6x6x8xf32>
    %c2_67 = arith.constant 2 : index
    %c1_68 = arith.constant 1 : index
    %100 = memref.load %arg1[%c2_67, %c1_68] : memref<3x3xf32, #tpu.memory_space<smem>>
    %101 = vector.broadcast %100 : f32 to vector<6x6x8xf32>
    %102 = arith.mulf %101, %99 : vector<6x6x8xf32>
    %103 = arith.addf %98, %102 : vector<6x6x8xf32>
    %c3_69 = arith.constant 3 : index
    %c3_70 = arith.constant 3 : index
    %c0_71 = arith.constant 0 : index
    %104 = tpu.strided_load %arg9[%c3_69, %c3_70, %c0_71] {strides = array<i32: 2, 2, 1>} : memref<16x16x8xf32, #tpu.memory_space<vmem>>, vector<6x6x8xf32>
    %c2_72 = arith.constant 2 : index
    %c2_73 = arith.constant 2 : index
    %105 = memref.load %arg1[%c2_72, %c2_73] : memref<3x3xf32, #tpu.memory_space<smem>>
    %106 = vector.broadcast %105 : f32 to vector<6x6x8xf32>
    %107 = arith.mulf %106, %104 : vector<6x6x8xf32>
    %108 = arith.addf %103, %107 : vector<6x6x8xf32>
    %109 = math.absf %108 : vector<6x6x8xf32>
    %cst_74 = arith.constant dense<0.000000e+00> : vector<6x8xf32>
    %110 = vector.multi_reduction <add>, %109, %cst_74 [0] : vector<6x6x8xf32> to vector<6x8xf32>
    %111 = vector.shape_cast %110 : vector<6x8xf32> to vector<1x6x8xf32>
    %cst_75 = arith.constant dense<0.000000e+00> : vector<1x8xf32>
    %112 = vector.multi_reduction <add>, %111, %cst_75 [1] : vector<1x6x8xf32> to vector<1x8xf32>
    %113 = vector.shape_cast %112 : vector<1x8xf32> to vector<1x1x8xf32>
    %cst_76 = arith.constant dense<0.000000e+00> : vector<1x1xf32>
    %114 = vector.multi_reduction <add>, %113, %cst_76 [2] : vector<1x1x8xf32> to vector<1x1xf32>
    %115 = vector.shape_cast %114 : vector<1x1xf32> to vector<1x1x1xf32>
    %c0_77 = arith.constant 0 : index
    %c0_78 = arith.constant 0 : index
    %c0_79 = arith.constant 0 : index
    %116 = vector.load %arg8[%c0_77, %c0_78, %c0_79] : memref<1x1x1xf32, #tpu.memory_space<vmem>>, vector<1x1x1xf32>
    tpu.vector_store %arg8[%c0_77, %c0_78, %c0_79], %115 {strides = array<i32>} : memref<1x1x1xf32, #tpu.memory_space<vmem>>, vector<1x1x1xf32>,
    return
  }
  func.func @transform_0(%arg0: i32) -> (i32, i32) {
    %c0_i32 = arith.constant 0 : i32
    %c0_i32_0 = arith.constant 0 : i32
    %c0_i32_1 = arith.constant 0 : i32
    return %c0_i32, %c0_i32_0 : i32, i32
  }
  func.func @transform_1(%arg0: i32) -> (i32, i32) {
    %c0_i32 = arith.constant 0 : i32
    %c0_i32_0 = arith.constant 0 : i32
    %c0_i32_1 = arith.constant 0 : i32
    return %c0_i32, %c0_i32_0 : i32, i32
  }
  func.func @transform_2(%arg0: i32) -> (i32, i32, i32, i32) {
    %c0_i32 = arith.constant 0 : i32
    %c0_i32_0 = arith.constant 0 : i32
    %c0_i32_1 = arith.constant 0 : i32
    %c0_i32_2 = arith.constant 0 : i32
    return %arg0, %c0_i32, %c0_i32_0, %c0_i32_1 : i32, i32, i32, i32
  }
  func.func @transform_3(%arg0: i32) -> (i32, i32, i32, i32) {
    %c0_i32 = arith.constant 0 : i32
    %c0_i32_0 = arith.constant 0 : i32
    %c0_i32_1 = arith.constant 0 : i32
    %c0_i32_2 = arith.constant 0 : i32
    return %arg0, %c0_i32, %c0_i32_0, %c0_i32_1 : i32, i32, i32, i32
  }
  func.func @transform_4(%arg0: i32) -> (i32, i32, i32, i32) {
    %c0_i32 = arith.constant 0 : i32
    %c0_i32_0 = arith.constant 0 : i32
    %c0_i32_1 = arith.constant 0 : i32
    %c0_i32_2 = arith.constant 0 : i32
    return %arg0, %c0_i32, %c0_i32_0, %c0_i32_1 : i32, i32, i32, i32
  }
  func.func @transform_5(%arg0: i32) -> (i32, i32, i32) {
    %c0_i32 = arith.constant 0 : i32
    %c0_i32_0 = arith.constant 0 : i32
    %c0_i32_1 = arith.constant 0 : i32
    return %arg0, %c0_i32, %c0_i32_0 : i32, i32, i32
  }
  func.func @transform_6(%arg0: i32) -> (i32, i32, i32) {
    %c0_i32 = arith.constant 0 : i32
    %c0_i32_0 = arith.constant 0 : i32
    %c0_i32_1 = arith.constant 0 : i32
    return %arg0, %c0_i32, %c0_i32_0 : i32, i32, i32
  }
  func.func @transform_7(%arg0: i32) -> (i32, i32, i32) {
    %c0_i32 = arith.constant 0 : i32
    %c0_i32_0 = arith.constant 0 : i32
    %c0_i32_1 = arith.constant 0 : i32
    return %arg0, %c0_i32, %c0_i32_0 : i32, i32, i32
  }
}

</mosaic_0001>

<llo_original>
// kernel: myarc_loss.1
$region0: #{myarc_loss.1}
  #allocation0 [shape = 'u32[]', space=smem, size = 0x4, offset = 0x4, fixed_abs, tag = 'smem constant byte address 0x4 - core index']
  #allocation1 [shape = 'u32[144,128]{1,0:T(1,128)}', space=vmem, size = 0x12000, scoped, tag = 'internal scratch']
  #allocation2 [shape = 'f32[16,16,8]{2,1,0:T(8,128)}', space=vmem, size = 0x20000, scoped, tag = 'scratch operand']
  %s0 = inlined_call_operand.vmem [shape: f32[3,3], index: 0, kind: input, shape index: {}]
  %s1 = inlined_call_operand.vmem [shape: f32[4,8], index: 1, kind: input, shape index: {}]
  %s2 = inlined_call_operand.vmem [shape: f32[2,16,16,8], index: 2, kind: input, shape index: {}]
  %s3 = inlined_call_operand.vmem [shape: f32[2,16,16,8], index: 3, kind: input, shape index: {}]
  %s4 = inlined_call_operand.vmem [shape: f32[2,16,16,4], index: 4, kind: input, shape index: {}]
  %s5 = inlined_call_operand.vmem [shape: f32[2,1,1], index: 5, kind: output, shape index: {0}]
  %s6 = inlined_call_operand.vmem [shape: f32[2,1,1], index: 6, kind: output, shape index: {1}]
  %s7 = inlined_call_operand.vmem [shape: f32[2,1,1], index: 7, kind: output, shape index: {2}]
  %8 = xla_tuple %s5, %s6, %s7
  %s9 = sld [smem:[#allocation0]]
  $region73: #{myarc_loss.1} parent=0
    _
  %s11 = ssub.s32 1, %s9
  %s12 = scalar_select 0, %s11, %s9
  $region1: #{myarc_loss.1} parent=0
    #allocation3 [shape = 'u8[2048]{0}', space=smem, size = 0x800, scoped, tag = 'input window, operand 0, single buffered']
    #allocation4 [shape = 's32[2]{0}', space=sflag, size = 0x8, scoped, tag = 'scoped memory for myarc_loss.1']
    %13 = vsyncpa [#allocation4], 0
    loop: start=0, step=1, limit=4
    $region2: #{myarc_loss.1} parent=1 // loop_pre_header
      _
    $region3: #{myarc_loss.1} parent=1 // loop_header
      %s15 = sphi 0, %s19
      %p16 = scmp.ge.s32.totalorder %s15, 4
      %s23 = sphi 0, %s23
      %s25 = sphi 0, %s23
      %s26 = sphi 0, %s25
      %s40 = sphi 0, %s26
      %s44 = sphi 0, %s44
      %s46 = sphi 0, %s44
      %s47 = sphi 0, %s46
      %s61 = sphi 0, %s47
      %s67 = sphi 0, %s69
      %s70 = sphi 0, %s67
      %s71 = sphi 0, %s70
      %s87 = sphi 0, %s71
      %s93 = sphi 0, %s95
      %s96 = sphi 0, %s93
      %s97 = sphi 0, %s96
      %s113 = sphi 0, %s97
      %s119 = sphi 0, %s121
      %s122 = sphi 0, %s119
      %s123 = sphi 0, %s122
      %s139 = sphi 0, %s123
      %s145 = sphi 0, %s147
      %s148 = sphi 0, %s145
      %s149 = sphi 0, %s148
      %s165 = sphi 0, %s149
      %s171 = sphi 0, %s173
      %s174 = sphi 0, %s171
      %s175 = sphi 0, %s174
      %s191 = sphi 0, %s175
      %s197 = sphi 0, %s199
      %s200 = sphi 0, %s197
      %s201 = sphi 0, %s200
      %s217 = sphi 0, %s201
    $region4: #{myarc_loss.1} parent=1 // loop_header_branch
      %18 = sbr.rel (%p16) target = $region8
    $region5: #{myarc_loss.1} parent=1 // loop_body
      %s20 = ssub.s32 %s15, 1
      %s21 = ssub.s32 %s15, 2
      %s22 = sadd.s32 %s15, 1
      %s24 = sadd.s32 %s23, 1
      %p27 = scmp.eq.s32.totalorder %s15, 1
      %p28 = scmp.ne.s32.totalorder %s23, %s25
      %p29 = scmp.eq.s32.totalorder %s15, 0
      %p30 = por %p28, %p29
      %p31 = scmp.ne.s32.totalorder %s23, %s25
      %p32 = scmp.eq.s32.totalorder %s20, 1
      %p33 = por %p31, %p32
      %p34 = scmp.ne.s32.totalorder %s25, %s26
      %p35 = scmp.eq.s32.totalorder %s20, 0
      %p36 = por %p34, %p35
      %p37 = scmp.ne.s32.totalorder %s25, %s26
      %p38 = scmp.eq.s32.totalorder %s21, 1
      %p39 = por %p37, %p38
      %p41 = scmp.ne.s32.totalorder %s26, %s40
      %p42 = scmp.eq.s32.totalorder %s21, 0
      %p43 = por %p41, %p42
      %s45 = sadd.s32 %s44, 1
      %p48 = scmp.eq.s32.totalorder %s15, 1
      %p49 = scmp.ne.s32.totalorder %s44, %s46
      %p50 = scmp.eq.s32.totalorder %s15, 0
      %p51 = por %p49, %p50
      %p52 = scmp.ne.s32.totalorder %s44, %s46
      %p53 = scmp.eq.s32.totalorder %s20, 1
      %p54 = por %p52, %p53
      %p55 = scmp.ne.s32.totalorder %s46, %s47
      %p56 = scmp.eq.s32.totalorder %s20, 0
      %p57 = por %p55, %p56
      %p58 = scmp.ne.s32.totalorder %s46, %s47
      %p59 = scmp.eq.s32.totalorder %s21, 1
      %p60 = por %p58, %p59
      %p62 = scmp.ne.s32.totalorder %s47, %s61
      %p63 = scmp.eq.s32.totalorder %s21, 0
      %p64 = por %p62, %p63
      %s65 = ssub.s32 %s15, %s22
      %p66 = scmp.eq.s32.totalorder %s65, 0
      %s68 = sadd.s32 %s67, 1
      %s69 = scalar_select %p66, %s67, %s68
      %p72 = pneg %p66
      %p73 = scmp.eq.s32.totalorder %s15, 1
      %p74 = por %p72, %p73
      %p75 = scmp.ne.s32.totalorder %s67, %s70
      %p76 = scmp.eq.s32.totalorder %s15, 0
      %p77 = por %p75, %p76
      %p78 = scmp.ne.s32.totalorder %s67, %s70
      %p79 = scmp.eq.s32.totalorder %s20, 1
      %p80 = por %p78, %p79
      %p81 = scmp.ne.s32.totalorder %s70, %s71
      %p82 = scmp.eq.s32.totalorder %s20, 0
      %p83 = por %p81, %p82
      %p84 = scmp.ne.s32.totalorder %s70, %s71
      %p85 = scmp.eq.s32.totalorder %s21, 1
      %p86 = por %p84, %p85
      %p88 = scmp.ne.s32.totalorder %s71, %s87
      %p89 = scmp.eq.s32.totalorder %s21, 0
      %p90 = por %p88, %p89
      %s91 = ssub.s32 %s15, %s22
      %p92 = scmp.eq.s32.totalorder %s91, 0
      %s94 = sadd.s32 %s93, 1
      %s95 = scalar_select %p92, %s93, %s94
      %p98 = pneg %p92
      %p99 = scmp.eq.s32.totalorder %s15, 1
      %p100 = por %p98, %p99
      %p101 = scmp.ne.s32.totalorder %s93, %s96
      %p102 = scmp.eq.s32.totalorder %s15, 0
      %p103 = por %p101, %p102
      %p104 = scmp.ne.s32.totalorder %s93, %s96
      %p105 = scmp.eq.s32.totalorder %s20, 1
      %p106 = por %p104, %p105
      %p107 = scmp.ne.s32.totalorder %s96, %s97
      %p108 = scmp.eq.s32.totalorder %s20, 0
      %p109 = por %p107, %p108
      %p110 = scmp.ne.s32.totalorder %s96, %s97
      %p111 = scmp.eq.s32.totalorder %s21, 1
      %p112 = por %p110, %p111
      %p114 = scmp.ne.s32.totalorder %s97, %s113
      %p115 = scmp.eq.s32.totalorder %s21, 0
      %p116 = por %p114, %p115
      %s117 = ssub.s32 %s15, %s22
      %p118 = scmp.eq.s32.totalorder %s117, 0
      %s120 = sadd.s32 %s119, 1
      %s121 = scalar_select %p118, %s119, %s120
      %p124 = pneg %p118
      %p125 = scmp.eq.s32.totalorder %s15, 1
      %p126 = por %p124, %p125
      %p127 = scmp.ne.s32.totalorder %s119, %s122
      %p128 = scmp.eq.s32.totalorder %s15, 0
      %p129 = por %p127, %p128
      %p130 = scmp.ne.s32.totalorder %s119, %s122
      %p131 = scmp.eq.s32.totalorder %s20, 1
      %p132 = por %p130, %p131
      %p133 = scmp.ne.s32.totalorder %s122, %s123
      %p134 = scmp.eq.s32.totalorder %s20, 0
      %p135 = por %p133, %p134
      %p136 = scmp.ne.s32.totalorder %s122, %s123
      %p137 = scmp.eq.s32.totalorder %s21, 1
      %p138 = por %p136, %p137
      %p140 = scmp.ne.s32.totalorder %s123, %s139
      %p141 = scmp.eq.s32.totalorder %s21, 0
      %p142 = por %p140, %p141
      %s143 = ssub.s32 %s15, %s22
      %p144 = scmp.eq.s32.totalorder %s143, 0
      %s146 = sadd.s32 %s145, 1
      %s147 = scalar_select %p144, %s145, %s146
      %p150 = pneg %p144
      %p151 = scmp.eq.s32.totalorder %s15, 1
      %p152 = por %p150, %p151
      %p153 = scmp.ne.s32.totalorder %s145, %s148
      %p154 = scmp.eq.s32.totalorder %s15, 0
      %p155 = por %p153, %p154
      %p156 = scmp.ne.s32.totalorder %s145, %s148
      %p157 = scmp.eq.s32.totalorder %s20, 1
      %p158 = por %p156, %p157
      %p159 = scmp.ne.s32.totalorder %s148, %s149
      %p160 = scmp.eq.s32.totalorder %s20, 0
      %p161 = por %p159, %p160
      %p162 = scmp.ne.s32.totalorder %s148, %s149
      %p163 = scmp.eq.s32.totalorder %s21, 1
      %p164 = por %p162, %p163
      %p166 = scmp.ne.s32.totalorder %s149, %s165
      %p167 = scmp.eq.s32.totalorder %s21, 0
      %p168 = por %p166, %p167
      %s169 = ssub.s32 %s15, %s22
      %p170 = scmp.eq.s32.totalorder %s169, 0
      %s172 = sadd.s32 %s171, 1
      %s173 = scalar_select %p170, %s171, %s172
      %p176 = pneg %p170
      %p177 = scmp.eq.s32.totalorder %s15, 1
      %p178 = por %p176, %p177
      %p179 = scmp.ne.s32.totalorder %s171, %s174
      %p180 = scmp.eq.s32.totalorder %s15, 0
      %p181 = por %p179, %p180
      %p182 = scmp.ne.s32.totalorder %s171, %s174
      %p183 = scmp.eq.s32.totalorder %s20, 1
      %p184 = por %p182, %p183
      %p185 = scmp.ne.s32.totalorder %s174, %s175
      %p186 = scmp.eq.s32.totalorder %s20, 0
      %p187 = por %p185, %p186
      %p188 = scmp.ne.s32.totalorder %s174, %s175
      %p189 = scmp.eq.s32.totalorder %s21, 1
      %p190 = por %p188, %p189
      %p192 = scmp.ne.s32.totalorder %s175, %s191
      %p193 = scmp.eq.s32.totalorder %s21, 0
      %p194 = por %p192, %p193
      %s195 = ssub.s32 %s15, %s22
      %p196 = scmp.eq.s32.totalorder %s195, 0
      %s198 = sadd.s32 %s197, 1
      %s199 = scalar_select %p196, %s197, %s198
      %p202 = pneg %p196
      %p203 = scmp.eq.s32.totalorder %s15, 1
      %p204 = por %p202, %p203
      %p205 = scmp.ne.s32.totalorder %s197, %s200
      %p206 = scmp.eq.s32.totalorder %s15, 0
      %p207 = por %p205, %p206
      %p208 = scmp.ne.s32.totalorder %s197, %s200
      %p209 = scmp.eq.s32.totalorder %s20, 1
      %p210 = por %p208, %p209
      %p211 = scmp.ne.s32.totalorder %s200, %s201
      %p212 = scmp.eq.s32.totalorder %s20, 0
      %p213 = por %p211, %p212
      %p214 = scmp.ne.s32.totalorder %s200, %s201
      %p215 = scmp.eq.s32.totalorder %s21, 1
      %p216 = por %p214, %p215
      %p218 = scmp.ne.s32.totalorder %s201, %s217
      %p219 = scmp.eq.s32.totalorder %s21, 0
      %p220 = por %p218, %p219
      %p221 = scmp.le.s32.totalorder 1, %s15
      %p222 = scmp.lt.s32.totalorder %s15, 3
      %p223 = pnand %p221, %p222
      %p224 = pneg %p223
      // Predicated region
      $region9: #{myarc_loss.1} parent=5 // pred_check
        _
      $region10: #{myarc_loss.1} parent=5 // pred_check_branch
        %226 = sbr.rel (%p223) target = $region12
      $region11: #{myarc_loss.1} parent=5 // pred_region
        %s227 = ssub.s32 %s15, 1
        // Predicated region
        $region13: #{myarc_loss.1} parent=11 // pred_check
          %p228 = pneg %p36
        $region14: #{myarc_loss.1} parent=11 // pred_check_branch
          %230 = sbr.rel (%p228) target = $region16
        $region15: #{myarc_loss.1} parent=11 // pred_region
          %s232 = ssub.s32 64, 64
          %233 = vsyncadd [#allocation4], %s232
          %s235 = sshll.u32 %s0, 4
          %s236 = int_to_ptr.vmem [resolvable:$true] %s235
          %238 = dma.vmem_to_smem %s236, 64, [#allocation3], [#allocation4]
        $region16: #{myarc_loss.1} parent=11 // pred_fallthru
          _
        // Predicated region
        $region17: #{myarc_loss.1} parent=11 // pred_check
          %p239 = pneg %p57
        $region18: #{myarc_loss.1} parent=11 // pred_check_branch
          %241 = sbr.rel (%p239) target = $region20
        $region19: #{myarc_loss.1} parent=11 // pred_region
          _
        $region20: #{myarc_loss.1} parent=11 // pred_fallthru
          _
      $region12: #{myarc_loss.1} parent=5 // pred_fallthru
        _
      %p242 = scmp.lt.s32.totalorder %s15, 2
      // Predicated region
      $region21: #{myarc_loss.1} parent=5 // pred_check
        %p243 = pneg %p242
      $region22: #{myarc_loss.1} parent=5 // pred_check_branch
        %245 = sbr.rel (%p243) target = $region24
      $region23: #{myarc_loss.1} parent=5 // pred_region
        // Predicated region
        $region25: #{myarc_loss.1} parent=23 // pred_check
          %p246 = pneg %p77
        $region26: #{myarc_loss.1} parent=23 // pred_check_branch
          %248 = sbr.rel (%p246) target = $region28
        $region27: #{myarc_loss.1} parent=23 // pred_region
          %p249 = scmp.lt.s32.totalorder %s15, 1
          %s250 = scalar_select %p249, %s15, 1
          %s251 = smul.addr %s250, 32
          %s252 = smul.addr %s251, 8
          %s253 = scalar_lea.vmem %s2, %s252
        $region28: #{myarc_loss.1} parent=23 // pred_fallthru
          _
        // Predicated region
        $region29: #{myarc_loss.1} parent=23 // pred_check
          %p254 = pneg %p103
        $region30: #{myarc_loss.1} parent=23 // pred_check_branch
          %256 = sbr.rel (%p254) target = $region32
        $region31: #{myarc_loss.1} parent=23 // pred_region
          %p257 = scmp.lt.s32.totalorder %s15, 1
          %s258 = scalar_select %p257, %s15, 1
          %s259 = smul.addr %s258, 32
          %s260 = smul.addr %s259, 8
          %s261 = scalar_lea.vmem %s3, %s260
        $region32: #{myarc_loss.1} parent=23 // pred_fallthru
          _
        // Predicated region
        $region33: #{myarc_loss.1} parent=23 // pred_check
          %p262 = pneg %p129
        $region34: #{myarc_loss.1} parent=23 // pred_check_branch
          %264 = sbr.rel (%p262) target = $region36
        $region35: #{myarc_loss.1} parent=23 // pred_region
          %p265 = scmp.lt.s32.totalorder %s15, 1
          %s266 = scalar_select %p265, %s15, 1
          %s267 = smul.addr %s266, 32
          %s268 = smul.addr %s267, 8
          %s269 = scalar_lea.vmem %s4, %s268
        $region36: #{myarc_loss.1} parent=23 // pred_fallthru
          _
      $region24: #{myarc_loss.1} parent=5 // pred_fallthru
        _
      %p270 = scmp.le.s32.totalorder 1, %s15
      %p271 = scmp.lt.s32.totalorder %s15, 3
      %p272 = pnand %p270, %p271
      %p273 = pneg %p272
      // Predicated region
      $region37: #{myarc_loss.1} parent=5 // pred_check
        _
      $region38: #{myarc_loss.1} parent=5 // pred_check_branch
        %275 = sbr.rel (%p272) target = $region40
      $region39: #{myarc_loss.1} parent=5 // pred_region
        %s276 = ssub.s32 %s15, 1
        // Predicated region
        $region41: #{myarc_loss.1} parent=39 // pred_check
          %p277 = pneg %p36
        $region42: #{myarc_loss.1} parent=39 // pred_check_branch
          %279 = sbr.rel (%p277) target = $region44
        $region43: #{myarc_loss.1} parent=39 // pred_region
          %280 = dma.done [#allocation4], 64
        $region44: #{myarc_loss.1} parent=39 // pred_fallthru
          _
        %281 = sfence
        %p282 = pneg %p36
        %p283 = pneg %p33
        %p284 = pneg %p57
        %p285 = pneg %p54
        %p286 = scmp.lt.s32.totalorder %s20, 1
        %s287 = scalar_select %p286, %s20, 1
        %s288 = smul.addr %s287, 32
        %s289 = smul.addr %s288, 8
        %s290 = scalar_lea.vmem %s2, %s289
        %p291 = pneg %p83
        %p292 = pneg %p80
        %p293 = scmp.lt.s32.totalorder %s20, 1
        %s294 = scalar_select %p293, %s20, 1
        %s295 = smul.addr %s294, 32
        %s296 = smul.addr %s295, 8
        %s297 = scalar_lea.vmem %s3, %s296
        %p298 = pneg %p109
        %p299 = pneg %p106
        %p300 = scmp.lt.s32.totalorder %s20, 1
        %s301 = scalar_select %p300, %s20, 1
        %s302 = smul.addr %s301, 32
        %s303 = smul.addr %s302, 8
        %s304 = scalar_lea.vmem %s4, %s303
        %p305 = pneg %p135
        %p306 = pneg %p132
        %p307 = pneg %p161
        %p308 = pneg %p158
        %p309 = scmp.lt.s32.totalorder %s20, 1
        %s310 = scalar_select %p309, %s20, 1
        %s311 = scalar_lea.vmem %s5, %s310
        %p312 = pneg %p187
        %p313 = pneg %p184
        %p314 = scmp.lt.s32.totalorder %s20, 1
        %s315 = scalar_select %p314, %s20, 1
        %s316 = scalar_lea.vmem %s6, %s315
        %p317 = pneg %p213
        %p318 = pneg %p210
        %p319 = scmp.lt.s32.totalorder %s20, 1
        %s320 = scalar_select %p319, %s20, 1
        %s321 = scalar_lea.vmem %s7, %s320
        %p322 = scmp.lt.s32.totalorder %s20, 1
        %s323 = scalar_select %p322, %s20, 1
        %s324 = smul.addr %s323, 32
        %s325 = smul.addr %s324, 8
        %s326 = scalar_lea.vmem %s2, %s325
        %p327 = scmp.lt.s32.totalorder %s20, 1
        %s328 = scalar_select %p327, %s20, 1
        %s329 = smul.addr %s328, 32
        %s330 = smul.addr %s329, 8
        %s331 = scalar_lea.vmem %s3, %s330
        %p332 = scmp.lt.s32.totalorder %s20, 1
        %s333 = scalar_select %p332, %s20, 1
        %s334 = smul.addr %s333, 32
        %s335 = smul.addr %s334, 8
        %s336 = scalar_lea.vmem %s4, %s335
        %p337 = scmp.lt.s32.totalorder %s20, 1
        %s338 = scalar_select %p337, %s20, 1
        %s339 = scalar_lea.vmem %s5, %s338
        %p340 = scmp.lt.s32.totalorder %s20, 1
        %s341 = scalar_select %p340, %s20, 1
        %s342 = scalar_lea.vmem %s6, %s341
        %p343 = scmp.lt.s32.totalorder %s20, 1
        %s344 = scalar_select %p343, %s20, 1
        %s345 = scalar_lea.vmem %s7, %s344
        %v346 = vld [vmem:[%s326] sm:$0xff]
        %v347 = vld [vmem:[%s326 + $0x8] sm:$0xff]
        %v348 = vld [vmem:[%s326 + $0x10] sm:$0xff]
        %v349 = vld [vmem:[%s326 + $0x18] sm:$0xff]
        %v350 = vld [vmem:[%s326 + $0x20] sm:$0xff]
        %v351 = vld [vmem:[%s326 + $0x28] sm:$0xff]
        %v352 = vld [vmem:[%s326 + $0x30] sm:$0xff]
        %v353 = vld [vmem:[%s326 + $0x38] sm:$0xff]
        %v354 = vld [vmem:[%s326 + $0x40] sm:$0xff]
        %v355 = vld [vmem:[%s326 + $0x48] sm:$0xff]
        %v356 = vld [vmem:[%s326 + $0x50] sm:$0xff]
        %v357 = vld [vmem:[%s326 + $0x58] sm:$0xff]
        %v358 = vld [vmem:[%s326 + $0x60] sm:$0xff]
        %v359 = vld [vmem:[%s326 + $0x68] sm:$0xff]
        %v360 = vld [vmem:[%s326 + $0x70] sm:$0xff]
        %v361 = vld [vmem:[%s326 + $0x78] sm:$0xff]
        %v362 = vld [vmem:[%s326 + $0x80] sm:$0xff]
        %v363 = vld [vmem:[%s326 + $0x88] sm:$0xff]
        %v364 = vld [vmem:[%s326 + $0x90] sm:$0xff]
        %v365 = vld [vmem:[%s326 + $0x98] sm:$0xff]
        %v366 = vld [vmem:[%s326 + $0xa0] sm:$0xff]
        %v367 = vld [vmem:[%s326 + $0xa8] sm:$0xff]
        %v368 = vld [vmem:[%s326 + $0xb0] sm:$0xff]
        %v369 = vld [vmem:[%s326 + $0xb8] sm:$0xff]
        %v370 = vld [vmem:[%s326 + $0xc0] sm:$0xff]
        %v371 = vld [vmem:[%s326 + $0xc8] sm:$0xff]
        %v372 = vld [vmem:[%s326 + $0xd0] sm:$0xff]
        %v373 = vld [vmem:[%s326 + $0xd8] sm:$0xff]
        %v374 = vld [vmem:[%s326 + $0xe0] sm:$0xff]
        %v375 = vld [vmem:[%s326 + $0xe8] sm:$0xff]
        %v376 = vld [vmem:[%s326 + $0xf0] sm:$0xff]
        %v377 = vld [vmem:[%s326 + $0xf8] sm:$0xff]
        %v378 = vld [vmem:[%s331] sm:$0xff]
        %v379 = vld [vmem:[%s331 + $0x8] sm:$0xff]
        %v380 = vld [vmem:[%s331 + $0x10] sm:$0xff]
        %v381 = vld [vmem:[%s331 + $0x18] sm:$0xff]
        %v382 = vld [vmem:[%s331 + $0x20] sm:$0xff]
        %v383 = vld [vmem:[%s331 + $0x28] sm:$0xff]
        %v384 = vld [vmem:[%s331 + $0x30] sm:$0xff]
        %v385 = vld [vmem:[%s331 + $0x38] sm:$0xff]
        %v386 = vld [vmem:[%s331 + $0x40] sm:$0xff]
        %v387 = vld [vmem:[%s331 + $0x48] sm:$0xff]
        %v388 = vld [vmem:[%s331 + $0x50] sm:$0xff]
        %v389 = vld [vmem:[%s331 + $0x58] sm:$0xff]
        %v390 = vld [vmem:[%s331 + $0x60] sm:$0xff]
        %v391 = vld [vmem:[%s331 + $0x68] sm:$0xff]
        %v392 = vld [vmem:[%s331 + $0x70] sm:$0xff]
        %v393 = vld [vmem:[%s331 + $0x78] sm:$0xff]
        %v394 = vld [vmem:[%s331 + $0x80] sm:$0xff]
        %v395 = vld [vmem:[%s331 + $0x88] sm:$0xff]
        %v396 = vld [vmem:[%s331 + $0x90] sm:$0xff]
        %v397 = vld [vmem:[%s331 + $0x98] sm:$0xff]
        %v398 = vld [vmem:[%s331 + $0xa0] sm:$0xff]
        %v399 = vld [vmem:[%s331 + $0xa8] sm:$0xff]
        %v400 = vld [vmem:[%s331 + $0xb0] sm:$0xff]
        %v401 = vld [vmem:[%s331 + $0xb8] sm:$0xff]
        %v402 = vld [vmem:[%s331 + $0xc0] sm:$0xff]
        %v403 = vld [vmem:[%s331 + $0xc8] sm:$0xff]
        %v404 = vld [vmem:[%s331 + $0xd0] sm:$0xff]
        %v405 = vld [vmem:[%s331 + $0xd8] sm:$0xff]
        %v406 = vld [vmem:[%s331 + $0xe0] sm:$0xff]
        %v407 = vld [vmem:[%s331 + $0xe8] sm:$0xff]
        %v408 = vld [vmem:[%s331 + $0xf0] sm:$0xff]
        %v409 = vld [vmem:[%s331 + $0xf8] sm:$0xff]
        %v410 = vld [vmem:[%s336] sm:$0xff]
        %v411 = vld [vmem:[%s336 + $0x8] sm:$0xff]
        %v412 = vld [vmem:[%s336 + $0x10] sm:$0xff]
        %v413 = vld [vmem:[%s336 + $0x18] sm:$0xff]
        %v414 = vld [vmem:[%s336 + $0x20] sm:$0xff]
        %v415 = vld [vmem:[%s336 + $0x28] sm:$0xff]
        %v416 = vld [vmem:[%s336 + $0x30] sm:$0xff]
        %v417 = vld [vmem:[%s336 + $0x38] sm:$0xff]
        %v418 = vld [vmem:[%s336 + $0x40] sm:$0xff]
        %v419 = vld [vmem:[%s336 + $0x48] sm:$0xff]
        %v420 = vld [vmem:[%s336 + $0x50] sm:$0xff]
        %v421 = vld [vmem:[%s336 + $0x58] sm:$0xff]
        %v422 = vld [vmem:[%s336 + $0x60] sm:$0xff]
        %v423 = vld [vmem:[%s336 + $0x68] sm:$0xff]
        %v424 = vld [vmem:[%s336 + $0x70] sm:$0xff]
        %v425 = vld [vmem:[%s336 + $0x78] sm:$0xff]
        %v426 = vld [vmem:[%s336 + $0x80] sm:$0xff]
        %v427 = vld [vmem:[%s336 + $0x88] sm:$0xff]
        %v428 = vld [vmem:[%s336 + $0x90] sm:$0xff]
        %v429 = vld [vmem:[%s336 + $0x98] sm:$0xff]
        %v430 = vld [vmem:[%s336 + $0xa0] sm:$0xff]
        %v431 = vld [vmem:[%s336 + $0xa8] sm:$0xff]
        %v432 = vld [vmem:[%s336 + $0xb0] sm:$0xff]
        %v433 = vld [vmem:[%s336 + $0xb8] sm:$0xff]
        %v434 = vld [vmem:[%s336 + $0xc0] sm:$0xff]
        %v435 = vld [vmem:[%s336 + $0xc8] sm:$0xff]
        %v436 = vld [vmem:[%s336 + $0xd0] sm:$0xff]
        %v437 = vld [vmem:[%s336 + $0xd8] sm:$0xff]
        %v438 = vld [vmem:[%s336 + $0xe0] sm:$0xff]
        %v439 = vld [vmem:[%s336 + $0xe8] sm:$0xff]
        %v440 = vld [vmem:[%s336 + $0xf0] sm:$0xff]
        %v441 = vld [vmem:[%s336 + $0xf8] sm:$0xff]
        %v442 = vsub.f32 %v346, %v378
        %v443 = vsub.f32 %v347, %v379
        %v444 = vsub.f32 %v348, %v380
        %v445 = vsub.f32 %v349, %v381
        %v446 = vsub.f32 %v350, %v382
        %v447 = vsub.f32 %v351, %v383
        %v448 = vsub.f32 %v352, %v384
        %v449 = vsub.f32 %v353, %v385
        %v450 = vsub.f32 %v354, %v386
        %v451 = vsub.f32 %v355, %v387
        %v452 = vsub.f32 %v356, %v388
        %v453 = vsub.f32 %v357, %v389
        %v454 = vsub.f32 %v358, %v390
        %v455 = vsub.f32 %v359, %v391
        %v456 = vsub.f32 %v360, %v392
        %v457 = vsub.f32 %v361, %v393
        %v458 = vsub.f32 %v362, %v394
        %v459 = vsub.f32 %v363, %v395
        %v460 = vsub.f32 %v364, %v396
        %v461 = vsub.f32 %v365, %v397
        %v462 = vsub.f32 %v366, %v398
        %v463 = vsub.f32 %v367, %v399
        %v464 = vsub.f32 %v368, %v400
        %v465 = vsub.f32 %v369, %v401
        %v466 = vsub.f32 %v370, %v402
        %v467 = vsub.f32 %v371, %v403
        %v468 = vsub.f32 %v372, %v404
        %v469 = vsub.f32 %v373, %v405
        %v470 = vsub.f32 %v374, %v406
        %v471 = vsub.f32 %v375, %v407
        %v472 = vsub.f32 %v376, %v408
        %v473 = vsub.f32 %v377, %v409
        %vm474 = vcmask 64512
        %475 = vst.msk [vmem:[#allocation2] sm:$0xff] %vm474, %v442
        %476 = vst.msk [vmem:[#allocation2 + $0x8] sm:$0xff] %vm474, %v443
        %477 = vst.msk [vmem:[#allocation2 + $0x10] sm:$0xff] %vm474, %v444
        %478 = vst.msk [vmem:[#allocation2 + $0x18] sm:$0xff] %vm474, %v445
        %479 = vst.msk [vmem:[#allocation2 + $0x20] sm:$0xff] %vm474, %v446
        %480 = vst.msk [vmem:[#allocation2 + $0x28] sm:$0xff] %vm474, %v447
        %481 = vst.msk [vmem:[#allocation2 + $0x30] sm:$0xff] %vm474, %v448
        %482 = vst.msk [vmem:[#allocation2 + $0x38] sm:$0xff] %vm474, %v449
        %483 = vst.msk [vmem:[#allocation2 + $0x40] sm:$0xff] %vm474, %v450
        %484 = vst.msk [vmem:[#allocation2 + $0x48] sm:$0xff] %vm474, %v451
        %485 = vst.msk [vmem:[#allocation2 + $0x50] sm:$0xff] %vm474, %v452
        %486 = vst.msk [vmem:[#allocation2 + $0x58] sm:$0xff] %vm474, %v453
        %487 = vst.msk [vmem:[#allocation2 + $0x60] sm:$0xff] %vm474, %v454
        %488 = vst.msk [vmem:[#allocation2 + $0x68] sm:$0xff] %vm474, %v455
        %489 = vst.msk [vmem:[#allocation2 + $0x70] sm:$0xff] %vm474, %v456
        %490 = vst.msk [vmem:[#allocation2 + $0x78] sm:$0xff] %vm474, %v457
        %491 = vst.msk [vmem:[#allocation2 + $0x80] sm:$0xff] %vm474, %v458
        %492 = vst.msk [vmem:[#allocation2 + $0x88] sm:$0xff] %vm474, %v459
        %493 = vst.msk [vmem:[#allocation2 + $0x90] sm:$0xff] %vm474, %v460
        %494 = vst.msk [vmem:[#allocation2 + $0x98] sm:$0xff] %vm474, %v461
        %495 = vst.msk [vmem:[#allocation2 + $0xa0] sm:$0xff] %vm474, %v462
        %496 = vst.msk [vmem:[#allocation2 + $0xa8] sm:$0xff] %vm474, %v463
        %497 = vst.msk [vmem:[#allocation2 + $0xb0] sm:$0xff] %vm474, %v464
        %498 = vst.msk [vmem:[#allocation2 + $0xb8] sm:$0xff] %vm474, %v465
        %499 = vst.msk [vmem:[#allocation2 + $0xc0] sm:$0xff] %vm474, %v466
        %500 = vst.msk [vmem:[#allocation2 + $0xc8] sm:$0xff] %vm474, %v467
        %501 = vst.msk [vmem:[#allocation2 + $0xd0] sm:$0xff] %vm474, %v468
        %502 = vst.msk [vmem:[#allocation2 + $0xd8] sm:$0xff] %vm474, %v469
        %503 = vst.msk [vmem:[#allocation2 + $0xe0] sm:$0xff] %vm474, %v470
        %504 = vst.msk [vmem:[#allocation2 + $0xe8] sm:$0xff] %vm474, %v471
        %505 = vst.msk [vmem:[#allocation2 + $0xf0] sm:$0xff] %vm474, %v472
        %506 = vst.msk [vmem:[#allocation2 + $0xf8] sm:$0xff] %vm474, %v473
        %v507 = vand.u32 2147483647, %v442
        %v508 = vand.u32 2147483647, %v443
        %v509 = vand.u32 2147483647, %v444
        %v510 = vand.u32 2147483647, %v445
        %v511 = vand.u32 2147483647, %v446
        %v512 = vand.u32 2147483647, %v447
        %v513 = vand.u32 2147483647, %v448
        %v514 = vand.u32 2147483647, %v449
        %v515 = vand.u32 2147483647, %v450
        %v516 = vand.u32 2147483647, %v451
        %v517 = vand.u32 2147483647, %v452
        %v518 = vand.u32 2147483647, %v453
        %v519 = vand.u32 2147483647, %v454
        %v520 = vand.u32 2147483647, %v455
        %v521 = vand.u32 2147483647, %v456
        %v522 = vand.u32 2147483647, %v457
        %v523 = vand.u32 2147483647, %v458
        %v524 = vand.u32 2147483647, %v459
        %v525 = vand.u32 2147483647, %v460
        %v526 = vand.u32 2147483647, %v461
        %v527 = vand.u32 2147483647, %v462
        %v528 = vand.u32 2147483647, %v463
        %v529 = vand.u32 2147483647, %v464
        %v530 = vand.u32 2147483647, %v465
        %v531 = vand.u32 2147483647, %v466
        %v532 = vand.u32 2147483647, %v467
        %v533 = vand.u32 2147483647, %v468
        %v534 = vand.u32 2147483647, %v469
        %v535 = vand.u32 2147483647, %v470
        %v536 = vand.u32 2147483647, %v471
        %v537 = vand.u32 2147483647, %v472
        %v538 = vand.u32 2147483647, %v473
        %v539 = vsel %vm474, %v507, 0.0
        %v540 = vsel %vm474, %v509, 0.0
        %v541 = vadd.f32 %v539, %v540
        %v542 = vsel %vm474, %v511, 0.0
        %v543 = vadd.f32 %v541, %v542
        %v544 = vsel %vm474, %v513, 0.0
        %v545 = vadd.f32 %v543, %v544
        %v546 = vsel %vm474, %v515, 0.0
        %v547 = vadd.f32 %v545, %v546
        %v548 = vsel %vm474, %v517, 0.0
        %v549 = vadd.f32 %v547, %v548
        %v550 = vsel %vm474, %v519, 0.0
        %v551 = vadd.f32 %v549, %v550
        %v552 = vsel %vm474, %v521, 0.0
        %v553 = vadd.f32 %v551, %v552
        %v554 = vsel %vm474, %v523, 0.0
        %v555 = vadd.f32 %v553, %v554
        %v556 = vsel %vm474, %v525, 0.0
        %v557 = vadd.f32 %v555, %v556
        %v558 = vsel %vm474, %v527, 0.0
        %v559 = vadd.f32 %v557, %v558
        %v560 = vsel %vm474, %v529, 0.0
        %v561 = vadd.f32 %v559, %v560
        %v562 = vsel %vm474, %v531, 0.0
        %v563 = vadd.f32 %v561, %v562
        %v564 = vsel %vm474, %v533, 0.0
        %v565 = vadd.f32 %v563, %v564
        %v566 = vsel %vm474, %v535, 0.0
        %v567 = vadd.f32 %v565, %v566
        %v568 = vsel %vm474, %v537, 0.0
        %v569 = vadd.f32 %v567, %v568
        %v570 = vsel %vm474, %v508, 0.0
        %v571 = vsel %vm474, %v510, 0.0
        %v572 = vadd.f32 %v570, %v571
        %v573 = vsel %vm474, %v512, 0.0
        %v574 = vadd.f32 %v572, %v573
        %v575 = vsel %vm474, %v514, 0.0
        %v576 = vadd.f32 %v574, %v575
        %v577 = vsel %vm474, %v516, 0.0
        %v578 = vadd.f32 %v576, %v577
        %v579 = vsel %vm474, %v518, 0.0
        %v580 = vadd.f32 %v578, %v579
        %v581 = vsel %vm474, %v520, 0.0
        %v582 = vadd.f32 %v580, %v581
        %v583 = vsel %vm474, %v522, 0.0
        %v584 = vadd.f32 %v582, %v583
        %v585 = vsel %vm474, %v524, 0.0
        %v586 = vadd.f32 %v584, %v585
        %v587 = vsel %vm474, %v526, 0.0
        %v588 = vadd.f32 %v586, %v587
        %v589 = vsel %vm474, %v528, 0.0
        %v590 = vadd.f32 %v588, %v589
        %v591 = vsel %vm474, %v530, 0.0
        %v592 = vadd.f32 %v590, %v591
        %v593 = vsel %vm474, %v532, 0.0
        %v594 = vadd.f32 %v592, %v593
        %v595 = vsel %vm474, %v534, 0.0
        %v596 = vadd.f32 %v594, %v595
        %v597 = vsel %vm474, %v536, 0.0
        %v598 = vadd.f32 %v596, %v597
        %v599 = vsel %vm474, %v538, 0.0
        %v600 = vadd.f32 %v598, %v599
        %v601 = vsel %vm474, %v569, 0.0
        %v602 = vsel %vm474, %v600, 0.0
        %v603 = vadd.f32 %v601, %v602
        %v604 = vrot.slane %v603, 4
        %v605 = vadd.f32 %v603, %v604
        %v606 = vrot.slane %v605, 2
        %v607 = vadd.f32 %v605, %v606
        %v608 = vrot.slane %v607, 1
        %v609 = vadd.f32 %v607, %v608
        %v610 = vsel %vm474, %v609, 0.0
        %611 = vadd.xlane.f32.xlu0 %v610
        %v612 = vpop.xlane.xlu0 %611
        %vm613 = vcmask 0
        %614 = vst.msk [vmem:[%s339] sm:$0x1] %vm613, %v612
        %v615 = vld [vmem:[%s1] sm:$0xf]
        %v616 = vlaneseq
        %v617 = vshrl.u32 %v616, 7
        %v618 = vsub.s32 0, %v617
        %v619 = vrot.slane %v615, %v618
        %v620 = vmul.f32 %v346, %v619
        %v621 = vmul.f32 %v347, %v619
        %v622 = vmul.f32 %v348, %v619
        %v623 = vmul.f32 %v349, %v619
        %v624 = vmul.f32 %v350, %v619
        %v625 = vmul.f32 %v351, %v619
        %v626 = vmul.f32 %v352, %v619
        %v627 = vmul.f32 %v353, %v619
        %v628 = vmul.f32 %v354, %v619
        %v629 = vmul.f32 %v355, %v619
        %v630 = vmul.f32 %v356, %v619
        %v631 = vmul.f32 %v357, %v619
        %v632 = vmul.f32 %v358, %v619
        %v633 = vmul.f32 %v359, %v619
        %v634 = vmul.f32 %v360, %v619
        %v635 = vmul.f32 %v361, %v619
        %v636 = vmul.f32 %v362, %v619
        %v637 = vmul.f32 %v363, %v619
        %v638 = vmul.f32 %v364, %v619
        %v639 = vmul.f32 %v365, %v619
        %v640 = vmul.f32 %v366, %v619
        %v641 = vmul.f32 %v367, %v619
        %v642 = vmul.f32 %v368, %v619
        %v643 = vmul.f32 %v369, %v619
        %v644 = vmul.f32 %v370, %v619
        %v645 = vmul.f32 %v371, %v619
        %v646 = vmul.f32 %v372, %v619
        %v647 = vmul.f32 %v373, %v619
        %v648 = vmul.f32 %v374, %v619
        %v649 = vmul.f32 %v375, %v619
        %v650 = vmul.f32 %v376, %v619
        %v651 = vmul.f32 %v377, %v619
        %v652 = vsel %vm474, %v620, 0.0
        %653 = vadd.xlane.f32.xlu0 %v652
        %v654 = vpop.xlane.xlu0 %653
        %v655 = vsel %vm474, %v621, 0.0
        %656 = vadd.xlane.f32.xlu0 %v655
        %v657 = vpop.xlane.xlu0 %656
        %v658 = vsel %vm474, %v622, 0.0
        %659 = vadd.xlane.f32.xlu0 %v658
        %v660 = vpop.xlane.xlu0 %659
        %v661 = vsel %vm474, %v623, 0.0
        %662 = vadd.xlane.f32.xlu0 %v661
        %v663 = vpop.xlane.xlu0 %662
        %v664 = vsel %vm474, %v624, 0.0
        %665 = vadd.xlane.f32.xlu0 %v664
        %v666 = vpop.xlane.xlu0 %665
        %v667 = vsel %vm474, %v625, 0.0
        %668 = vadd.xlane.f32.xlu0 %v667
        %v669 = vpop.xlane.xlu0 %668
        %v670 = vsel %vm474, %v626, 0.0
        %671 = vadd.xlane.f32.xlu0 %v670
        %v672 = vpop.xlane.xlu0 %671
        %v673 = vsel %vm474, %v627, 0.0
        %674 = vadd.xlane.f32.xlu0 %v673
        %v675 = vpop.xlane.xlu0 %674
        %v676 = vsel %vm474, %v628, 0.0
        %677 = vadd.xlane.f32.xlu0 %v676
        %v678 = vpop.xlane.xlu0 %677
        %v679 = vsel %vm474, %v629, 0.0
        %680 = vadd.xlane.f32.xlu0 %v679
        %v681 = vpop.xlane.xlu0 %680
        %v682 = vsel %vm474, %v630, 0.0
        %683 = vadd.xlane.f32.xlu0 %v682
        %v684 = vpop.xlane.xlu0 %683
        %v685 = vsel %vm474, %v631, 0.0
        %686 = vadd.xlane.f32.xlu0 %v685
        %v687 = vpop.xlane.xlu0 %686
        %v688 = vsel %vm474, %v632, 0.0
        %689 = vadd.xlane.f32.xlu0 %v688
        %v690 = vpop.xlane.xlu0 %689
        %v691 = vsel %vm474, %v633, 0.0
        %692 = vadd.xlane.f32.xlu0 %v691
        %v693 = vpop.xlane.xlu0 %692
        %v694 = vsel %vm474, %v634, 0.0
        %695 = vadd.xlane.f32.xlu0 %v694
        %v696 = vpop.xlane.xlu0 %695
        %v697 = vsel %vm474, %v635, 0.0
        %698 = vadd.xlane.f32.xlu0 %v697
        %v699 = vpop.xlane.xlu0 %698
        %v700 = vsel %vm474, %v636, 0.0
        %701 = vadd.xlane.f32.xlu0 %v700
        %v702 = vpop.xlane.xlu0 %701
        %v703 = vsel %vm474, %v637, 0.0
        %704 = vadd.xlane.f32.xlu0 %v703
        %v705 = vpop.xlane.xlu0 %704
        %v706 = vsel %vm474, %v638, 0.0
        %707 = vadd.xlane.f32.xlu0 %v706
        %v708 = vpop.xlane.xlu0 %707
        %v709 = vsel %vm474, %v639, 0.0
        %710 = vadd.xlane.f32.xlu0 %v709
        %v711 = vpop.xlane.xlu0 %710
        %v712 = vsel %vm474, %v640, 0.0
        %713 = vadd.xlane.f32.xlu0 %v712
        %v714 = vpop.xlane.xlu0 %713
        %v715 = vsel %vm474, %v641, 0.0
        %716 = vadd.xlane.f32.xlu0 %v715
        %v717 = vpop.xlane.xlu0 %716
        %v718 = vsel %vm474, %v642, 0.0
        %719 = vadd.xlane.f32.xlu0 %v718
        %v720 = vpop.xlane.xlu0 %719
        %v721 = vsel %vm474, %v643, 0.0
        %722 = vadd.xlane.f32.xlu0 %v721
        %v723 = vpop.xlane.xlu0 %722
        %v724 = vsel %vm474, %v644, 0.0
        %725 = vadd.xlane.f32.xlu0 %v724
        %v726 = vpop.xlane.xlu0 %725
        %v727 = vsel %vm474, %v645, 0.0
        %728 = vadd.xlane.f32.xlu0 %v727
        %v729 = vpop.xlane.xlu0 %728
        %v730 = vsel %vm474, %v646, 0.0
        %731 = vadd.xlane.f32.xlu0 %v730
        %v732 = vpop.xlane.xlu0 %731
        %v733 = vsel %vm474, %v647, 0.0
        %734 = vadd.xlane.f32.xlu0 %v733
        %v735 = vpop.xlane.xlu0 %734
        %v736 = vsel %vm474, %v648, 0.0
        %737 = vadd.xlane.f32.xlu0 %v736
        %v738 = vpop.xlane.xlu0 %737
        %v739 = vsel %vm474, %v649, 0.0
        %740 = vadd.xlane.f32.xlu0 %v739
        %v741 = vpop.xlane.xlu0 %740
        %v742 = vsel %vm474, %v650, 0.0
        %743 = vadd.xlane.f32.xlu0 %v742
        %v744 = vpop.xlane.xlu0 %743
        %v745 = vsel %vm474, %v651, 0.0
        %746 = vadd.xlane.f32.xlu0 %v745
        %v747 = vpop.xlane.xlu0 %746
        %v748 = vsub.f32 %v654, %v410
        %v749 = vsub.f32 %v657, %v411
        %v750 = vsub.f32 %v660, %v412
        %v751 = vsub.f32 %v663, %v413
        %v752 = vsub.f32 %v666, %v414
        %v753 = vsub.f32 %v669, %v415
        %v754 = vsub.f32 %v672, %v416
        %v755 = vsub.f32 %v675, %v417
        %v756 = vsub.f32 %v678, %v418
        %v757 = vsub.f32 %v681, %v419
        %v758 = vsub.f32 %v684, %v420
        %v759 = vsub.f32 %v687, %v421
        %v760 = vsub.f32 %v690, %v422
        %v761 = vsub.f32 %v693, %v423
        %v762 = vsub.f32 %v696, %v424
        %v763 = vsub.f32 %v699, %v425
        %v764 = vsub.f32 %v702, %v426
        %v765 = vsub.f32 %v705, %v427
        %v766 = vsub.f32 %v708, %v428
        %v767 = vsub.f32 %v711, %v429
        %v768 = vsub.f32 %v714, %v430
        %v769 = vsub.f32 %v717, %v431
        %v770 = vsub.f32 %v720, %v432
        %v771 = vsub.f32 %v723, %v433
        %v772 = vsub.f32 %v726, %v434
        %v773 = vsub.f32 %v729, %v435
        %v774 = vsub.f32 %v732, %v436
        %v775 = vsub.f32 %v735, %v437
        %v776 = vsub.f32 %v738, %v438
        %v777 = vsub.f32 %v741, %v439
        %v778 = vsub.f32 %v744, %v440
        %v779 = vsub.f32 %v747, %v441
        %v780 = vand.u32 2147483647, %v748
        %v781 = vand.u32 2147483647, %v749
        %v782 = vand.u32 2147483647, %v750
        %v783 = vand.u32 2147483647, %v751
        %v784 = vand.u32 2147483647, %v752
        %v785 = vand.u32 2147483647, %v753
        %v786 = vand.u32 2147483647, %v754
        %v787 = vand.u32 2147483647, %v755
        %v788 = vand.u32 2147483647, %v756
        %v789 = vand.u32 2147483647, %v757
        %v790 = vand.u32 2147483647, %v758
        %v791 = vand.u32 2147483647, %v759
        %v792 = vand.u32 2147483647, %v760
        %v793 = vand.u32 2147483647, %v761
        %v794 = vand.u32 2147483647, %v762
        %v795 = vand.u32 2147483647, %v763
        %v796 = vand.u32 2147483647, %v764
        %v797 = vand.u32 2147483647, %v765
        %v798 = vand.u32 2147483647, %v766
        %v799 = vand.u32 2147483647, %v767
        %v800 = vand.u32 2147483647, %v768
        %v801 = vand.u32 2147483647, %v769
        %v802 = vand.u32 2147483647, %v770
        %v803 = vand.u32 2147483647, %v771
        %v804 = vand.u32 2147483647, %v772
        %v805 = vand.u32 2147483647, %v773
        %v806 = vand.u32 2147483647, %v774
        %v807 = vand.u32 2147483647, %v775
        %v808 = vand.u32 2147483647, %v776
        %v809 = vand.u32 2147483647, %v777
        %v810 = vand.u32 2147483647, %v778
        %v811 = vand.u32 2147483647, %v779
        %v812 = vlaneseq
        %v813 = vshrl.u32 %v812, 7
        %v814 = vsub.s32 1, %v813
        %v815 = vrot.slane %v615, %v814
        %v816 = vmul.f32 %v346, %v815
        %v817 = vmul.f32 %v347, %v815
        %v818 = vmul.f32 %v348, %v815
        %v819 = vmul.f32 %v349, %v815
        %v820 = vmul.f32 %v350, %v815
        %v821 = vmul.f32 %v351, %v815
        %v822 = vmul.f32 %v352, %v815
        %v823 = vmul.f32 %v353, %v815
        %v824 = vmul.f32 %v354, %v815
        %v825 = vmul.f32 %v355, %v815
        %v826 = vmul.f32 %v356, %v815
        %v827 = vmul.f32 %v357, %v815
        %v828 = vmul.f32 %v358, %v815
        %v829 = vmul.f32 %v359, %v815
        %v830 = vmul.f32 %v360, %v815
        %v831 = vmul.f32 %v361, %v815
        %v832 = vmul.f32 %v362, %v815
        %v833 = vmul.f32 %v363, %v815
        %v834 = vmul.f32 %v364, %v815
        %v835 = vmul.f32 %v365, %v815
        %v836 = vmul.f32 %v366, %v815
        %v837 = vmul.f32 %v367, %v815
        %v838 = vmul.f32 %v368, %v815
        %v839 = vmul.f32 %v369, %v815
        %v840 = vmul.f32 %v370, %v815
        %v841 = vmul.f32 %v371, %v815
        %v842 = vmul.f32 %v372, %v815
        %v843 = vmul.f32 %v373, %v815
        %v844 = vmul.f32 %v374, %v815
        %v845 = vmul.f32 %v375, %v815
        %v846 = vmul.f32 %v376, %v815
        %v847 = vmul.f32 %v377, %v815
        %v848 = vsel %vm474, %v816, 0.0
        %849 = vadd.xlane.f32.xlu0 %v848
        %v850 = vpop.xlane.xlu0 %849
        %v851 = vsel %vm474, %v817, 0.0
        %852 = vadd.xlane.f32.xlu0 %v851
        %v853 = vpop.xlane.xlu0 %852
        %v854 = vsel %vm474, %v818, 0.0
        %855 = vadd.xlane.f32.xlu0 %v854
        %v856 = vpop.xlane.xlu0 %855
        %v857 = vsel %vm474, %v819, 0.0
        %858 = vadd.xlane.f32.xlu0 %v857
        %v859 = vpop.xlane.xlu0 %858
        %v860 = vsel %vm474, %v820, 0.0
        %861 = vadd.xlane.f32.xlu0 %v860
        %v862 = vpop.xlane.xlu0 %861
        %v863 = vsel %vm474, %v821, 0.0
        %864 = vadd.xlane.f32.xlu0 %v863
        %v865 = vpop.xlane.xlu0 %864
        %v866 = vsel %vm474, %v822, 0.0
        %867 = vadd.xlane.f32.xlu0 %v866
        %v868 = vpop.xlane.xlu0 %867
        %v869 = vsel %vm474, %v823, 0.0
        %870 = vadd.xlane.f32.xlu0 %v869
        %v871 = vpop.xlane.xlu0 %870
        %v872 = vsel %vm474, %v824, 0.0
        %873 = vadd.xlane.f32.xlu0 %v872
        %v874 = vpop.xlane.xlu0 %873
        %v875 = vsel %vm474, %v825, 0.0
        %876 = vadd.xlane.f32.xlu0 %v875
        %v877 = vpop.xlane.xlu0 %876
        %v878 = vsel %vm474, %v826, 0.0
        %879 = vadd.xlane.f32.xlu0 %v878
        %v880 = vpop.xlane.xlu0 %879
        %v881 = vsel %vm474, %v827, 0.0
        %882 = vadd.xlane.f32.xlu0 %v881
        %v883 = vpop.xlane.xlu0 %882
        %v884 = vsel %vm474, %v828, 0.0
        %885 = vadd.xlane.f32.xlu0 %v884
        %v886 = vpop.xlane.xlu0 %885
        %v887 = vsel %vm474, %v829, 0.0
        %888 = vadd.xlane.f32.xlu0 %v887
        %v889 = vpop.xlane.xlu0 %888
        %v890 = vsel %vm474, %v830, 0.0
        %891 = vadd.xlane.f32.xlu0 %v890
        %v892 = vpop.xlane.xlu0 %891
        %v893 = vsel %vm474, %v831, 0.0
        %894 = vadd.xlane.f32.xlu0 %v893
        %v895 = vpop.xlane.xlu0 %894
        %v896 = vsel %vm474, %v832, 0.0
        %897 = vadd.xlane.f32.xlu0 %v896
        %v898 = vpop.xlane.xlu0 %897
        %v899 = vsel %vm474, %v833, 0.0
        %900 = vadd.xlane.f32.xlu0 %v899
        %v901 = vpop.xlane.xlu0 %900
        %v902 = vsel %vm474, %v834, 0.0
        %903 = vadd.xlane.f32.xlu0 %v902
        %v904 = vpop.xlane.xlu0 %903
        %v905 = vsel %vm474, %v835, 0.0
        %906 = vadd.xlane.f32.xlu0 %v905
        %v907 = vpop.xlane.xlu0 %906
        %v908 = vsel %vm474, %v836, 0.0
        %909 = vadd.xlane.f32.xlu0 %v908
        %v910 = vpop.xlane.xlu0 %909
        %v911 = vsel %vm474, %v837, 0.0
        %912 = vadd.xlane.f32.xlu0 %v911
        %v913 = vpop.xlane.xlu0 %912
        %v914 = vsel %vm474, %v838, 0.0
        %915 = vadd.xlane.f32.xlu0 %v914
        %v916 = vpop.xlane.xlu0 %915
        %v917 = vsel %vm474, %v839, 0.0
        %918 = vadd.xlane.f32.xlu0 %v917
        %v919 = vpop.xlane.xlu0 %918
        %v920 = vsel %vm474, %v840, 0.0
        %921 = vadd.xlane.f32.xlu0 %v920
        %v922 = vpop.xlane.xlu0 %921
        %v923 = vsel %vm474, %v841, 0.0
        %924 = vadd.xlane.f32.xlu0 %v923
        %v925 = vpop.xlane.xlu0 %924
        %v926 = vsel %vm474, %v842, 0.0
        %927 = vadd.xlane.f32.xlu0 %v926
        %v928 = vpop.xlane.xlu0 %927
        %v929 = vsel %vm474, %v843, 0.0
        %930 = vadd.xlane.f32.xlu0 %v929
        %v931 = vpop.xlane.xlu0 %930
        %v932 = vsel %vm474, %v844, 0.0
        %933 = vadd.xlane.f32.xlu0 %v932
        %v934 = vpop.xlane.xlu0 %933
        %v935 = vsel %vm474, %v845, 0.0
        %936 = vadd.xlane.f32.xlu0 %v935
        %v937 = vpop.xlane.xlu0 %936
        %v938 = vsel %vm474, %v846, 0.0
        %939 = vadd.xlane.f32.xlu0 %v938
        %v940 = vpop.xlane.xlu0 %939
        %v941 = vsel %vm474, %v847, 0.0
        %942 = vadd.xlane.f32.xlu0 %v941
        %v943 = vpop.xlane.xlu0 %942
        %v944 = vsub.f32 %v850, %v410
        %v945 = vsub.f32 %v853, %v411
        %v946 = vsub.f32 %v856, %v412
        %v947 = vsub.f32 %v859, %v413
        %v948 = vsub.f32 %v862, %v414
        %v949 = vsub.f32 %v865, %v415
        %v950 = vsub.f32 %v868, %v416
        %v951 = vsub.f32 %v871, %v417
        %v952 = vsub.f32 %v874, %v418
        %v953 = vsub.f32 %v877, %v419
        %v954 = vsub.f32 %v880, %v420
        %v955 = vsub.f32 %v883, %v421
        %v956 = vsub.f32 %v886, %v422
        %v957 = vsub.f32 %v889, %v423
        %v958 = vsub.f32 %v892, %v424
        %v959 = vsub.f32 %v895, %v425
        %v960 = vsub.f32 %v898, %v426
        %v961 = vsub.f32 %v901, %v427
        %v962 = vsub.f32 %v904, %v428
        %v963 = vsub.f32 %v907, %v429
        %v964 = vsub.f32 %v910, %v430
        %v965 = vsub.f32 %v913, %v431
        %v966 = vsub.f32 %v916, %v432
        %v967 = vsub.f32 %v919, %v433
        %v968 = vsub.f32 %v922, %v434
        %v969 = vsub.f32 %v925, %v435
        %v970 = vsub.f32 %v928, %v436
        %v971 = vsub.f32 %v931, %v437
        %v972 = vsub.f32 %v934, %v438
        %v973 = vsub.f32 %v937, %v439
        %v974 = vsub.f32 %v940, %v440
        %v975 = vsub.f32 %v943, %v441
        %v976 = vand.u32 2147483647, %v944
        %v977 = vand.u32 2147483647, %v945
        %v978 = vand.u32 2147483647, %v946
        %v979 = vand.u32 2147483647, %v947
        %v980 = vand.u32 2147483647, %v948
        %v981 = vand.u32 2147483647, %v949
        %v982 = vand.u32 2147483647, %v950
        %v983 = vand.u32 2147483647, %v951
        %v984 = vand.u32 2147483647, %v952
        %v985 = vand.u32 2147483647, %v953
        %v986 = vand.u32 2147483647, %v954
        %v987 = vand.u32 2147483647, %v955
        %v988 = vand.u32 2147483647, %v956
        %v989 = vand.u32 2147483647, %v957
        %v990 = vand.u32 2147483647, %v958
        %v991 = vand.u32 2147483647, %v959
        %v992 = vand.u32 2147483647, %v960
        %v993 = vand.u32 2147483647, %v961
        %v994 = vand.u32 2147483647, %v962
        %v995 = vand.u32 2147483647, %v963
        %v996 = vand.u32 2147483647, %v964
        %v997 = vand.u32 2147483647, %v965
        %v998 = vand.u32 2147483647, %v966
        %v999 = vand.u32 2147483647, %v967
        %v1000 = vand.u32 2147483647, %v968
        %v1001 = vand.u32 2147483647, %v969
        %v1002 = vand.u32 2147483647, %v970
        %v1003 = vand.u32 2147483647, %v971
        %v1004 = vand.u32 2147483647, %v972
        %v1005 = vand.u32 2147483647, %v973
        %v1006 = vand.u32 2147483647, %v974
        %v1007 = vand.u32 2147483647, %v975
        %1040 = vrot.lane.b32.xlu0 %v976, 127
        %v1041 = vpop.permute.xlu0 %1040
        %1042 = vrot.lane.b32.xlu0 %v977, 127
        %v1043 = vpop.permute.xlu0 %1042
        %1044 = vrot.lane.b32.xlu0 %v978, 127
        %v1045 = vpop.permute.xlu0 %1044
        %1046 = vrot.lane.b32.xlu0 %v979, 127
        %v1047 = vpop.permute.xlu0 %1046
        %1048 = vrot.lane.b32.xlu0 %v980, 127
        %v1049 = vpop.permute.xlu0 %1048
        %1050 = vrot.lane.b32.xlu0 %v981, 127
        %v1051 = vpop.permute.xlu0 %1050
        %1052 = vrot.lane.b32.xlu0 %v982, 127
        %v1053 = vpop.permute.xlu0 %1052
        %1054 = vrot.lane.b32.xlu0 %v983, 127
        %v1055 = vpop.permute.xlu0 %1054
        %1056 = vrot.lane.b32.xlu0 %v984, 127
        %v1057 = vpop.permute.xlu0 %1056
        %1058 = vrot.lane.b32.xlu0 %v985, 127
        %v1059 = vpop.permute.xlu0 %1058
        %1060 = vrot.lane.b32.xlu0 %v986, 127
        %v1061 = vpop.permute.xlu0 %1060
        %1062 = vrot.lane.b32.xlu0 %v987, 127
        %v1063 = vpop.permute.xlu0 %1062
        %1064 = vrot.lane.b32.xlu0 %v988, 127
        %v1065 = vpop.permute.xlu0 %1064
        %1066 = vrot.lane.b32.xlu0 %v989, 127
        %v1067 = vpop.permute.xlu0 %1066
        %1068 = vrot.lane.b32.xlu0 %v990, 127
        %v1069 = vpop.permute.xlu0 %1068
        %1070 = vrot.lane.b32.xlu0 %v991, 127
        %v1071 = vpop.permute.xlu0 %1070
        %1072 = vrot.lane.b32.xlu0 %v992, 127
        %v1073 = vpop.permute.xlu0 %1072
        %1074 = vrot.lane.b32.xlu0 %v993, 127
        %v1075 = vpop.permute.xlu0 %1074
        %1076 = vrot.lane.b32.xlu0 %v994, 127
        %v1077 = vpop.permute.xlu0 %1076
        %1078 = vrot.lane.b32.xlu0 %v995, 127
        %v1079 = vpop.permute.xlu0 %1078
        %1080 = vrot.lane.b32.xlu0 %v996, 127
        %v1081 = vpop.permute.xlu0 %1080
        %1082 = vrot.lane.b32.xlu0 %v997, 127
        %v1083 = vpop.permute.xlu0 %1082
        %1084 = vrot.lane.b32.xlu0 %v998, 127
        %v1085 = vpop.permute.xlu0 %1084
        %1086 = vrot.lane.b32.xlu0 %v999, 127
        %v1087 = vpop.permute.xlu0 %1086
        %1088 = vrot.lane.b32.xlu0 %v1000, 127
        %v1089 = vpop.permute.xlu0 %1088
        %1090 = vrot.lane.b32.xlu0 %v1001, 127
        %v1091 = vpop.permute.xlu0 %1090
        %1092 = vrot.lane.b32.xlu0 %v1002, 127
        %v1093 = vpop.permute.xlu0 %1092
        %1094 = vrot.lane.b32.xlu0 %v1003, 127
        %v1095 = vpop.permute.xlu0 %1094
        %1096 = vrot.lane.b32.xlu0 %v1004, 127
        %v1097 = vpop.permute.xlu0 %1096
        %1098 = vrot.lane.b32.xlu0 %v1005, 127
        %v1099 = vpop.permute.xlu0 %1098
        %1100 = vrot.lane.b32.xlu0 %v1006, 127
        %v1101 = vpop.permute.xlu0 %1100
        %1102 = vrot.lane.b32.xlu0 %v1007, 127
        %v1103 = vpop.permute.xlu0 %1102
        %v1136 = vadd.f32 %v780, %v1041
        %v1137 = vadd.f32 %v781, %v1043
        %v1138 = vadd.f32 %v782, %v1045
        %v1139 = vadd.f32 %v783, %v1047
        %v1140 = vadd.f32 %v784, %v1049
        %v1141 = vadd.f32 %v785, %v1051
        %v1142 = vadd.f32 %v786, %v1053
        %v1143 = vadd.f32 %v787, %v1055
        %v1144 = vadd.f32 %v788, %v1057
        %v1145 = vadd.f32 %v789, %v1059
        %v1146 = vadd.f32 %v790, %v1061
        %v1147 = vadd.f32 %v791, %v1063
        %v1148 = vadd.f32 %v792, %v1065
        %v1149 = vadd.f32 %v793, %v1067
        %v1150 = vadd.f32 %v794, %v1069
        %v1151 = vadd.f32 %v795, %v1071
        %v1152 = vadd.f32 %v796, %v1073
        %v1153 = vadd.f32 %v797, %v1075
        %v1154 = vadd.f32 %v798, %v1077
        %v1155 = vadd.f32 %v799, %v1079
        %v1156 = vadd.f32 %v800, %v1081
        %v1157 = vadd.f32 %v801, %v1083
        %v1158 = vadd.f32 %v802, %v1085
        %v1159 = vadd.f32 %v803, %v1087
        %v1160 = vadd.f32 %v804, %v1089
        %v1161 = vadd.f32 %v805, %v1091
        %v1162 = vadd.f32 %v806, %v1093
        %v1163 = vadd.f32 %v807, %v1095
        %v1164 = vadd.f32 %v808, %v1097
        %v1165 = vadd.f32 %v809, %v1099
        %v1166 = vadd.f32 %v810, %v1101
        %v1167 = vadd.f32 %v811, %v1103
        %v1168 = vlaneseq
        %v1169 = vshrl.u32 %v1168, 7
        %v1170 = vsub.s32 2, %v1169
        %v1171 = vrot.slane %v615, %v1170
        %v1172 = vmul.f32 %v346, %v1171
        %v1173 = vmul.f32 %v347, %v1171
        %v1174 = vmul.f32 %v348, %v1171
        %v1175 = vmul.f32 %v349, %v1171
        %v1176 = vmul.f32 %v350, %v1171
        %v1177 = vmul.f32 %v351, %v1171
        %v1178 = vmul.f32 %v352, %v1171
        %v1179 = vmul.f32 %v353, %v1171
        %v1180 = vmul.f32 %v354, %v1171
        %v1181 = vmul.f32 %v355, %v1171
        %v1182 = vmul.f32 %v356, %v1171
        %v1183 = vmul.f32 %v357, %v1171
        %v1184 = vmul.f32 %v358, %v1171
        %v1185 = vmul.f32 %v359, %v1171
        %v1186 = vmul.f32 %v360, %v1171
        %v1187 = vmul.f32 %v361, %v1171
        %v1188 = vmul.f32 %v362, %v1171
        %v1189 = vmul.f32 %v363, %v1171
        %v1190 = vmul.f32 %v364, %v1171
        %v1191 = vmul.f32 %v365, %v1171
        %v1192 = vmul.f32 %v366, %v1171
        %v1193 = vmul.f32 %v367, %v1171
        %v1194 = vmul.f32 %v368, %v1171
        %v1195 = vmul.f32 %v369, %v1171
        %v1196 = vmul.f32 %v370, %v1171
        %v1197 = vmul.f32 %v371, %v1171
        %v1198 = vmul.f32 %v372, %v1171
        %v1199 = vmul.f32 %v373, %v1171
        %v1200 = vmul.f32 %v374, %v1171
        %v1201 = vmul.f32 %v375, %v1171
        %v1202 = vmul.f32 %v376, %v1171
        %v1203 = vmul.f32 %v377, %v1171
        %v1204 = vsel %vm474, %v1172, 0.0
        %1205 = vadd.xlane.f32.xlu0 %v1204
        %v1206 = vpop.xlane.xlu0 %1205
        %v1207 = vsel %vm474, %v1173, 0.0
        %1208 = vadd.xlane.f32.xlu0 %v1207
        %v1209 = vpop.xlane.xlu0 %1208
        %v1210 = vsel %vm474, %v1174, 0.0
        %1211 = vadd.xlane.f32.xlu0 %v1210
        %v1212 = vpop.xlane.xlu0 %1211
        %v1213 = vsel %vm474, %v1175, 0.0
        %1214 = vadd.xlane.f32.xlu0 %v1213
        %v1215 = vpop.xlane.xlu0 %1214
        %v1216 = vsel %vm474, %v1176, 0.0
        %1217 = vadd.xlane.f32.xlu0 %v1216
        %v1218 = vpop.xlane.xlu0 %1217
        %v1219 = vsel %vm474, %v1177, 0.0
        %1220 = vadd.xlane.f32.xlu0 %v1219
        %v1221 = vpop.xlane.xlu0 %1220
        %v1222 = vsel %vm474, %v1178, 0.0
        %1223 = vadd.xlane.f32.xlu0 %v1222
        %v1224 = vpop.xlane.xlu0 %1223
        %v1225 = vsel %vm474, %v1179, 0.0
        %1226 = vadd.xlane.f32.xlu0 %v1225
        %v1227 = vpop.xlane.xlu0 %1226
        %v1228 = vsel %vm474, %v1180, 0.0
        %1229 = vadd.xlane.f32.xlu0 %v1228
        %v1230 = vpop.xlane.xlu0 %1229
        %v1231 = vsel %vm474, %v1181, 0.0
        %1232 = vadd.xlane.f32.xlu0 %v1231
        %v1233 = vpop.xlane.xlu0 %1232
        %v1234 = vsel %vm474, %v1182, 0.0
        %1235 = vadd.xlane.f32.xlu0 %v1234
        %v1236 = vpop.xlane.xlu0 %1235
        %v1237 = vsel %vm474, %v1183, 0.0
        %1238 = vadd.xlane.f32.xlu0 %v1237
        %v1239 = vpop.xlane.xlu0 %1238
        %v1240 = vsel %vm474, %v1184, 0.0
        %1241 = vadd.xlane.f32.xlu0 %v1240
        %v1242 = vpop.xlane.xlu0 %1241
        %v1243 = vsel %vm474, %v1185, 0.0
        %1244 = vadd.xlane.f32.xlu0 %v1243
        %v1245 = vpop.xlane.xlu0 %1244
        %v1246 = vsel %vm474, %v1186, 0.0
        %1247 = vadd.xlane.f32.xlu0 %v1246
        %v1248 = vpop.xlane.xlu0 %1247
        %v1249 = vsel %vm474, %v1187, 0.0
        %1250 = vadd.xlane.f32.xlu0 %v1249
        %v1251 = vpop.xlane.xlu0 %1250
        %v1252 = vsel %vm474, %v1188, 0.0
        %1253 = vadd.xlane.f32.xlu0 %v1252
        %v1254 = vpop.xlane.xlu0 %1253
        %v1255 = vsel %vm474, %v1189, 0.0
        %1256 = vadd.xlane.f32.xlu0 %v1255
        %v1257 = vpop.xlane.xlu0 %1256
        %v1258 = vsel %vm474, %v1190, 0.0
        %1259 = vadd.xlane.f32.xlu0 %v1258
        %v1260 = vpop.xlane.xlu0 %1259
        %v1261 = vsel %vm474, %v1191, 0.0
        %1262 = vadd.xlane.f32.xlu0 %v1261
        %v1263 = vpop.xlane.xlu0 %1262
        %v1264 = vsel %vm474, %v1192, 0.0
        %1265 = vadd.xlane.f32.xlu0 %v1264
        %v1266 = vpop.xlane.xlu0 %1265
        %v1267 = vsel %vm474, %v1193, 0.0
        %1268 = vadd.xlane.f32.xlu0 %v1267
        %v1269 = vpop.xlane.xlu0 %1268
        %v1270 = vsel %vm474, %v1194, 0.0
        %1271 = vadd.xlane.f32.xlu0 %v1270
        %v1272 = vpop.xlane.xlu0 %1271
        %v1273 = vsel %vm474, %v1195, 0.0
        %1274 = vadd.xlane.f32.xlu0 %v1273
        %v1275 = vpop.xlane.xlu0 %1274
        %v1276 = vsel %vm474, %v1196, 0.0
        %1277 = vadd.xlane.f32.xlu0 %v1276
        %v1278 = vpop.xlane.xlu0 %1277
        %v1279 = vsel %vm474, %v1197, 0.0
        %1280 = vadd.xlane.f32.xlu0 %v1279
        %v1281 = vpop.xlane.xlu0 %1280
        %v1282 = vsel %vm474, %v1198, 0.0
        %1283 = vadd.xlane.f32.xlu0 %v1282
        %v1284 = vpop.xlane.xlu0 %1283
        %v1285 = vsel %vm474, %v1199, 0.0
        %1286 = vadd.xlane.f32.xlu0 %v1285
        %v1287 = vpop.xlane.xlu0 %1286
        %v1288 = vsel %vm474, %v1200, 0.0
        %1289 = vadd.xlane.f32.xlu0 %v1288
        %v1290 = vpop.xlane.xlu0 %1289
        %v1291 = vsel %vm474, %v1201, 0.0
        %1292 = vadd.xlane.f32.xlu0 %v1291
        %v1293 = vpop.xlane.xlu0 %1292
        %v1294 = vsel %vm474, %v1202, 0.0
        %1295 = vadd.xlane.f32.xlu0 %v1294
        %v1296 = vpop.xlane.xlu0 %1295
        %v1297 = vsel %vm474, %v1203, 0.0
        %1298 = vadd.xlane.f32.xlu0 %v1297
        %v1299 = vpop.xlane.xlu0 %1298
        %v1300 = vsub.f32 %v1206, %v410
        %v1301 = vsub.f32 %v1209, %v411
        %v1302 = vsub.f32 %v1212, %v412
        %v1303 = vsub.f32 %v1215, %v413
        %v1304 = vsub.f32 %v1218, %v414
        %v1305 = vsub.f32 %v1221, %v415
        %v1306 = vsub.f32 %v1224, %v416
        %v1307 = vsub.f32 %v1227, %v417
        %v1308 = vsub.f32 %v1230, %v418
        %v1309 = vsub.f32 %v1233, %v419
        %v1310 = vsub.f32 %v1236, %v420
        %v1311 = vsub.f32 %v1239, %v421
        %v1312 = vsub.f32 %v1242, %v422
        %v1313 = vsub.f32 %v1245, %v423
        %v1314 = vsub.f32 %v1248, %v424
        %v1315 = vsub.f32 %v1251, %v425
        %v1316 = vsub.f32 %v1254, %v426
        %v1317 = vsub.f32 %v1257, %v427
        %v1318 = vsub.f32 %v1260, %v428
        %v1319 = vsub.f32 %v1263, %v429
        %v1320 = vsub.f32 %v1266, %v430
        %v1321 = vsub.f32 %v1269, %v431
        %v1322 = vsub.f32 %v1272, %v432
        %v1323 = vsub.f32 %v1275, %v433
        %v1324 = vsub.f32 %v1278, %v434
        %v1325 = vsub.f32 %v1281, %v435
        %v1326 = vsub.f32 %v1284, %v436
        %v1327 = vsub.f32 %v1287, %v437
        %v1328 = vsub.f32 %v1290, %v438
        %v1329 = vsub.f32 %v1293, %v439
        %v1330 = vsub.f32 %v1296, %v440
        %v1331 = vsub.f32 %v1299, %v441
        %v1332 = vand.u32 2147483647, %v1300
        %v1333 = vand.u32 2147483647, %v1301
        %v1334 = vand.u32 2147483647, %v1302
        %v1335 = vand.u32 2147483647, %v1303
        %v1336 = vand.u32 2147483647, %v1304
        %v1337 = vand.u32 2147483647, %v1305
        %v1338 = vand.u32 2147483647, %v1306
        %v1339 = vand.u32 2147483647, %v1307
        %v1340 = vand.u32 2147483647, %v1308
        %v1341 = vand.u32 2147483647, %v1309
        %v1342 = vand.u32 2147483647, %v1310
        %v1343 = vand.u32 2147483647, %v1311
        %v1344 = vand.u32 2147483647, %v1312
        %v1345 = vand.u32 2147483647, %v1313
        %v1346 = vand.u32 2147483647, %v1314
        %v1347 = vand.u32 2147483647, %v1315
        %v1348 = vand.u32 2147483647, %v1316
        %v1349 = vand.u32 2147483647, %v1317
        %v1350 = vand.u32 2147483647, %v1318
        %v1351 = vand.u32 2147483647, %v1319
        %v1352 = vand.u32 2147483647, %v1320
        %v1353 = vand.u32 2147483647, %v1321
        %v1354 = vand.u32 2147483647, %v1322
        %v1355 = vand.u32 2147483647, %v1323
        %v1356 = vand.u32 2147483647, %v1324
        %v1357 = vand.u32 2147483647, %v1325
        %v1358 = vand.u32 2147483647, %v1326
        %v1359 = vand.u32 2147483647, %v1327
        %v1360 = vand.u32 2147483647, %v1328
        %v1361 = vand.u32 2147483647, %v1329
        %v1362 = vand.u32 2147483647, %v1330
        %v1363 = vand.u32 2147483647, %v1331
        %1396 = vrot.lane.b32.xlu0 %v1332, 126
        %v1397 = vpop.permute.xlu0 %1396
        %1398 = vrot.lane.b32.xlu0 %v1333, 126
        %v1399 = vpop.permute.xlu0 %1398
        %1400 = vrot.lane.b32.xlu0 %v1334, 126
        %v1401 = vpop.permute.xlu0 %1400
        %1402 = vrot.lane.b32.xlu0 %v1335, 126
        %v1403 = vpop.permute.xlu0 %1402
        %1404 = vrot.lane.b32.xlu0 %v1336, 126
        %v1405 = vpop.permute.xlu0 %1404
        %1406 = vrot.lane.b32.xlu0 %v1337, 126
        %v1407 = vpop.permute.xlu0 %1406
        %1408 = vrot.lane.b32.xlu0 %v1338, 126
        %v1409 = vpop.permute.xlu0 %1408
        %1410 = vrot.lane.b32.xlu0 %v1339, 126
        %v1411 = vpop.permute.xlu0 %1410
        %1412 = vrot.lane.b32.xlu0 %v1340, 126
        %v1413 = vpop.permute.xlu0 %1412
        %1414 = vrot.lane.b32.xlu0 %v1341, 126
        %v1415 = vpop.permute.xlu0 %1414
        %1416 = vrot.lane.b32.xlu0 %v1342, 126
        %v1417 = vpop.permute.xlu0 %1416
        %1418 = vrot.lane.b32.xlu0 %v1343, 126
        %v1419 = vpop.permute.xlu0 %1418
        %1420 = vrot.lane.b32.xlu0 %v1344, 126
        %v1421 = vpop.permute.xlu0 %1420
        %1422 = vrot.lane.b32.xlu0 %v1345, 126
        %v1423 = vpop.permute.xlu0 %1422
        %1424 = vrot.lane.b32.xlu0 %v1346, 126
        %v1425 = vpop.permute.xlu0 %1424
        %1426 = vrot.lane.b32.xlu0 %v1347, 126
        %v1427 = vpop.permute.xlu0 %1426
        %1428 = vrot.lane.b32.xlu0 %v1348, 126
        %v1429 = vpop.permute.xlu0 %1428
        %1430 = vrot.lane.b32.xlu0 %v1349, 126
        %v1431 = vpop.permute.xlu0 %1430
        %1432 = vrot.lane.b32.xlu0 %v1350, 126
        %v1433 = vpop.permute.xlu0 %1432
        %1434 = vrot.lane.b32.xlu0 %v1351, 126
        %v1435 = vpop.permute.xlu0 %1434
        %1436 = vrot.lane.b32.xlu0 %v1352, 126
        %v1437 = vpop.permute.xlu0 %1436
        %1438 = vrot.lane.b32.xlu0 %v1353, 126
        %v1439 = vpop.permute.xlu0 %1438
        %1440 = vrot.lane.b32.xlu0 %v1354, 126
        %v1441 = vpop.permute.xlu0 %1440
        %1442 = vrot.lane.b32.xlu0 %v1355, 126
        %v1443 = vpop.permute.xlu0 %1442
        %1444 = vrot.lane.b32.xlu0 %v1356, 126
        %v1445 = vpop.permute.xlu0 %1444
        %1446 = vrot.lane.b32.xlu0 %v1357, 126
        %v1447 = vpop.permute.xlu0 %1446
        %1448 = vrot.lane.b32.xlu0 %v1358, 126
        %v1449 = vpop.permute.xlu0 %1448
        %1450 = vrot.lane.b32.xlu0 %v1359, 126
        %v1451 = vpop.permute.xlu0 %1450
        %1452 = vrot.lane.b32.xlu0 %v1360, 126
        %v1453 = vpop.permute.xlu0 %1452
        %1454 = vrot.lane.b32.xlu0 %v1361, 126
        %v1455 = vpop.permute.xlu0 %1454
        %1456 = vrot.lane.b32.xlu0 %v1362, 126
        %v1457 = vpop.permute.xlu0 %1456
        %1458 = vrot.lane.b32.xlu0 %v1363, 126
        %v1459 = vpop.permute.xlu0 %1458
        %v1492 = vadd.f32 %v1136, %v1397
        %v1493 = vadd.f32 %v1137, %v1399
        %v1494 = vadd.f32 %v1138, %v1401
        %v1495 = vadd.f32 %v1139, %v1403
        %v1496 = vadd.f32 %v1140, %v1405
        %v1497 = vadd.f32 %v1141, %v1407
        %v1498 = vadd.f32 %v1142, %v1409
        %v1499 = vadd.f32 %v1143, %v1411
        %v1500 = vadd.f32 %v1144, %v1413
        %v1501 = vadd.f32 %v1145, %v1415
        %v1502 = vadd.f32 %v1146, %v1417
        %v1503 = vadd.f32 %v1147, %v1419
        %v1504 = vadd.f32 %v1148, %v1421
        %v1505 = vadd.f32 %v1149, %v1423
        %v1506 = vadd.f32 %v1150, %v1425
        %v1507 = vadd.f32 %v1151, %v1427
        %v1508 = vadd.f32 %v1152, %v1429
        %v1509 = vadd.f32 %v1153, %v1431
        %v1510 = vadd.f32 %v1154, %v1433
        %v1511 = vadd.f32 %v1155, %v1435
        %v1512 = vadd.f32 %v1156, %v1437
        %v1513 = vadd.f32 %v1157, %v1439
        %v1514 = vadd.f32 %v1158, %v1441
        %v1515 = vadd.f32 %v1159, %v1443
        %v1516 = vadd.f32 %v1160, %v1445
        %v1517 = vadd.f32 %v1161, %v1447
        %v1518 = vadd.f32 %v1162, %v1449
        %v1519 = vadd.f32 %v1163, %v1451
        %v1520 = vadd.f32 %v1164, %v1453
        %v1521 = vadd.f32 %v1165, %v1455
        %v1522 = vadd.f32 %v1166, %v1457
        %v1523 = vadd.f32 %v1167, %v1459
        %v1524 = vlaneseq
        %v1525 = vshrl.u32 %v1524, 7
        %v1526 = vsub.s32 3, %v1525
        %v1527 = vrot.slane %v615, %v1526
        %v1528 = vmul.f32 %v346, %v1527
        %v1529 = vmul.f32 %v347, %v1527
        %v1530 = vmul.f32 %v348, %v1527
        %v1531 = vmul.f32 %v349, %v1527
        %v1532 = vmul.f32 %v350, %v1527
        %v1533 = vmul.f32 %v351, %v1527
        %v1534 = vmul.f32 %v352, %v1527
        %v1535 = vmul.f32 %v353, %v1527
        %v1536 = vmul.f32 %v354, %v1527
        %v1537 = vmul.f32 %v355, %v1527
        %v1538 = vmul.f32 %v356, %v1527
        %v1539 = vmul.f32 %v357, %v1527
        %v1540 = vmul.f32 %v358, %v1527
        %v1541 = vmul.f32 %v359, %v1527
        %v1542 = vmul.f32 %v360, %v1527
        %v1543 = vmul.f32 %v361, %v1527
        %v1544 = vmul.f32 %v362, %v1527
        %v1545 = vmul.f32 %v363, %v1527
        %v1546 = vmul.f32 %v364, %v1527
        %v1547 = vmul.f32 %v365, %v1527
        %v1548 = vmul.f32 %v366, %v1527
        %v1549 = vmul.f32 %v367, %v1527
        %v1550 = vmul.f32 %v368, %v1527
        %v1551 = vmul.f32 %v369, %v1527
        %v1552 = vmul.f32 %v370, %v1527
        %v1553 = vmul.f32 %v371, %v1527
        %v1554 = vmul.f32 %v372, %v1527
        %v1555 = vmul.f32 %v373, %v1527
        %v1556 = vmul.f32 %v374, %v1527
        %v1557 = vmul.f32 %v375, %v1527
        %v1558 = vmul.f32 %v376, %v1527
        %v1559 = vmul.f32 %v377, %v1527
        %v1560 = vsel %vm474, %v1528, 0.0
        %1561 = vadd.xlane.f32.xlu0 %v1560
        %v1562 = vpop.xlane.xlu0 %1561
        %v1563 = vsel %vm474, %v1529, 0.0
        %1564 = vadd.xlane.f32.xlu0 %v1563
        %v1565 = vpop.xlane.xlu0 %1564
        %v1566 = vsel %vm474, %v1530, 0.0
        %1567 = vadd.xlane.f32.xlu0 %v1566
        %v1568 = vpop.xlane.xlu0 %1567
        %v1569 = vsel %vm474, %v1531, 0.0
        %1570 = vadd.xlane.f32.xlu0 %v1569
        %v1571 = vpop.xlane.xlu0 %1570
        %v1572 = vsel %vm474, %v1532, 0.0
        %1573 = vadd.xlane.f32.xlu0 %v1572
        %v1574 = vpop.xlane.xlu0 %1573
        %v1575 = vsel %vm474, %v1533, 0.0
        %1576 = vadd.xlane.f32.xlu0 %v1575
        %v1577 = vpop.xlane.xlu0 %1576
        %v1578 = vsel %vm474, %v1534, 0.0
        %1579 = vadd.xlane.f32.xlu0 %v1578
        %v1580 = vpop.xlane.xlu0 %1579
        %v1581 = vsel %vm474, %v1535, 0.0
        %1582 = vadd.xlane.f32.xlu0 %v1581
        %v1583 = vpop.xlane.xlu0 %1582
        %v1584 = vsel %vm474, %v1536, 0.0
        %1585 = vadd.xlane.f32.xlu0 %v1584
        %v1586 = vpop.xlane.xlu0 %1585
        %v1587 = vsel %vm474, %v1537, 0.0
        %1588 = vadd.xlane.f32.xlu0 %v1587
        %v1589 = vpop.xlane.xlu0 %1588
        %v1590 = vsel %vm474, %v1538, 0.0
        %1591 = vadd.xlane.f32.xlu0 %v1590
        %v1592 = vpop.xlane.xlu0 %1591
        %v1593 = vsel %vm474, %v1539, 0.0
        %1594 = vadd.xlane.f32.xlu0 %v1593
        %v1595 = vpop.xlane.xlu0 %1594
        %v1596 = vsel %vm474, %v1540, 0.0
        %1597 = vadd.xlane.f32.xlu0 %v1596
        %v1598 = vpop.xlane.xlu0 %1597
        %v1599 = vsel %vm474, %v1541, 0.0
        %1600 = vadd.xlane.f32.xlu0 %v1599
        %v1601 = vpop.xlane.xlu0 %1600
        %v1602 = vsel %vm474, %v1542, 0.0
        %1603 = vadd.xlane.f32.xlu0 %v1602
        %v1604 = vpop.xlane.xlu0 %1603
        %v1605 = vsel %vm474, %v1543, 0.0
        %1606 = vadd.xlane.f32.xlu0 %v1605
        %v1607 = vpop.xlane.xlu0 %1606
        %v1608 = vsel %vm474, %v1544, 0.0
        %1609 = vadd.xlane.f32.xlu0 %v1608
        %v1610 = vpop.xlane.xlu0 %1609
        %v1611 = vsel %vm474, %v1545, 0.0
        %1612 = vadd.xlane.f32.xlu0 %v1611
        %v1613 = vpop.xlane.xlu0 %1612
        %v1614 = vsel %vm474, %v1546, 0.0
        %1615 = vadd.xlane.f32.xlu0 %v1614
        %v1616 = vpop.xlane.xlu0 %1615
        %v1617 = vsel %vm474, %v1547, 0.0
        %1618 = vadd.xlane.f32.xlu0 %v1617
        %v1619 = vpop.xlane.xlu0 %1618
        %v1620 = vsel %vm474, %v1548, 0.0
        %1621 = vadd.xlane.f32.xlu0 %v1620
        %v1622 = vpop.xlane.xlu0 %1621
        %v1623 = vsel %vm474, %v1549, 0.0
        %1624 = vadd.xlane.f32.xlu0 %v1623
        %v1625 = vpop.xlane.xlu0 %1624
        %v1626 = vsel %vm474, %v1550, 0.0
        %1627 = vadd.xlane.f32.xlu0 %v1626
        %v1628 = vpop.xlane.xlu0 %1627
        %v1629 = vsel %vm474, %v1551, 0.0
        %1630 = vadd.xlane.f32.xlu0 %v1629
        %v1631 = vpop.xlane.xlu0 %1630
        %v1632 = vsel %vm474, %v1552, 0.0
        %1633 = vadd.xlane.f32.xlu0 %v1632
        %v1634 = vpop.xlane.xlu0 %1633
        %v1635 = vsel %vm474, %v1553, 0.0
        %1636 = vadd.xlane.f32.xlu0 %v1635
        %v1637 = vpop.xlane.xlu0 %1636
        %v1638 = vsel %vm474, %v1554, 0.0
        %1639 = vadd.xlane.f32.xlu0 %v1638
        %v1640 = vpop.xlane.xlu0 %1639
        %v1641 = vsel %vm474, %v1555, 0.0
        %1642 = vadd.xlane.f32.xlu0 %v1641
        %v1643 = vpop.xlane.xlu0 %1642
        %v1644 = vsel %vm474, %v1556, 0.0
        %1645 = vadd.xlane.f32.xlu0 %v1644
        %v1646 = vpop.xlane.xlu0 %1645
        %v1647 = vsel %vm474, %v1557, 0.0
        %1648 = vadd.xlane.f32.xlu0 %v1647
        %v1649 = vpop.xlane.xlu0 %1648
        %v1650 = vsel %vm474, %v1558, 0.0
        %1651 = vadd.xlane.f32.xlu0 %v1650
        %v1652 = vpop.xlane.xlu0 %1651
        %v1653 = vsel %vm474, %v1559, 0.0
        %1654 = vadd.xlane.f32.xlu0 %v1653
        %v1655 = vpop.xlane.xlu0 %1654
        %v1656 = vsub.f32 %v1562, %v410
        %v1657 = vsub.f32 %v1565, %v411
        %v1658 = vsub.f32 %v1568, %v412
        %v1659 = vsub.f32 %v1571, %v413
        %v1660 = vsub.f32 %v1574, %v414
        %v1661 = vsub.f32 %v1577, %v415
        %v1662 = vsub.f32 %v1580, %v416
        %v1663 = vsub.f32 %v1583, %v417
        %v1664 = vsub.f32 %v1586, %v418
        %v1665 = vsub.f32 %v1589, %v419
        %v1666 = vsub.f32 %v1592, %v420
        %v1667 = vsub.f32 %v1595, %v421
        %v1668 = vsub.f32 %v1598, %v422
        %v1669 = vsub.f32 %v1601, %v423
        %v1670 = vsub.f32 %v1604, %v424
        %v1671 = vsub.f32 %v1607, %v425
        %v1672 = vsub.f32 %v1610, %v426
        %v1673 = vsub.f32 %v1613, %v427
        %v1674 = vsub.f32 %v1616, %v428
        %v1675 = vsub.f32 %v1619, %v429
        %v1676 = vsub.f32 %v1622, %v430
        %v1677 = vsub.f32 %v1625, %v431
        %v1678 = vsub.f32 %v1628, %v432
        %v1679 = vsub.f32 %v1631, %v433
        %v1680 = vsub.f32 %v1634, %v434
        %v1681 = vsub.f32 %v1637, %v435
        %v1682 = vsub.f32 %v1640, %v436
        %v1683 = vsub.f32 %v1643, %v437
        %v1684 = vsub.f32 %v1646, %v438
        %v1685 = vsub.f32 %v1649, %v439
        %v1686 = vsub.f32 %v1652, %v440
        %v1687 = vsub.f32 %v1655, %v441
        %v1688 = vand.u32 2147483647, %v1656
        %v1689 = vand.u32 2147483647, %v1657
        %v1690 = vand.u32 2147483647, %v1658
        %v1691 = vand.u32 2147483647, %v1659
        %v1692 = vand.u32 2147483647, %v1660
        %v1693 = vand.u32 2147483647, %v1661
        %v1694 = vand.u32 2147483647, %v1662
        %v1695 = vand.u32 2147483647, %v1663
        %v1696 = vand.u32 2147483647, %v1664
        %v1697 = vand.u32 2147483647, %v1665
        %v1698 = vand.u32 2147483647, %v1666
        %v1699 = vand.u32 2147483647, %v1667
        %v1700 = vand.u32 2147483647, %v1668
        %v1701 = vand.u32 2147483647, %v1669
        %v1702 = vand.u32 2147483647, %v1670
        %v1703 = vand.u32 2147483647, %v1671
        %v1704 = vand.u32 2147483647, %v1672
        %v1705 = vand.u32 2147483647, %v1673
        %v1706 = vand.u32 2147483647, %v1674
        %v1707 = vand.u32 2147483647, %v1675
        %v1708 = vand.u32 2147483647, %v1676
        %v1709 = vand.u32 2147483647, %v1677
        %v1710 = vand.u32 2147483647, %v1678
        %v1711 = vand.u32 2147483647, %v1679
        %v1712 = vand.u32 2147483647, %v1680
        %v1713 = vand.u32 2147483647, %v1681
        %v1714 = vand.u32 2147483647, %v1682
        %v1715 = vand.u32 2147483647, %v1683
        %v1716 = vand.u32 2147483647, %v1684
        %v1717 = vand.u32 2147483647, %v1685
        %v1718 = vand.u32 2147483647, %v1686
        %v1719 = vand.u32 2147483647, %v1687
        %1752 = vrot.lane.b32.xlu0 %v1688, 125
        %v1753 = vpop.permute.xlu0 %1752
        %1754 = vrot.lane.b32.xlu0 %v1689, 125
        %v1755 = vpop.permute.xlu0 %1754
        %1756 = vrot.lane.b32.xlu0 %v1690, 125
        %v1757 = vpop.permute.xlu0 %1756
        %1758 = vrot.lane.b32.xlu0 %v1691, 125
        %v1759 = vpop.permute.xlu0 %1758
        %1760 = vrot.lane.b32.xlu0 %v1692, 125
        %v1761 = vpop.permute.xlu0 %1760
        %1762 = vrot.lane.b32.xlu0 %v1693, 125
        %v1763 = vpop.permute.xlu0 %1762
        %1764 = vrot.lane.b32.xlu0 %v1694, 125
        %v1765 = vpop.permute.xlu0 %1764
        %1766 = vrot.lane.b32.xlu0 %v1695, 125
        %v1767 = vpop.permute.xlu0 %1766
        %1768 = vrot.lane.b32.xlu0 %v1696, 125
        %v1769 = vpop.permute.xlu0 %1768
        %1770 = vrot.lane.b32.xlu0 %v1697, 125
        %v1771 = vpop.permute.xlu0 %1770
        %1772 = vrot.lane.b32.xlu0 %v1698, 125
        %v1773 = vpop.permute.xlu0 %1772
        %1774 = vrot.lane.b32.xlu0 %v1699, 125
        %v1775 = vpop.permute.xlu0 %1774
        %1776 = vrot.lane.b32.xlu0 %v1700, 125
        %v1777 = vpop.permute.xlu0 %1776
        %1778 = vrot.lane.b32.xlu0 %v1701, 125
        %v1779 = vpop.permute.xlu0 %1778
        %1780 = vrot.lane.b32.xlu0 %v1702, 125
        %v1781 = vpop.permute.xlu0 %1780
        %1782 = vrot.lane.b32.xlu0 %v1703, 125
        %v1783 = vpop.permute.xlu0 %1782
        %1784 = vrot.lane.b32.xlu0 %v1704, 125
        %v1785 = vpop.permute.xlu0 %1784
        %1786 = vrot.lane.b32.xlu0 %v1705, 125
        %v1787 = vpop.permute.xlu0 %1786
        %1788 = vrot.lane.b32.xlu0 %v1706, 125
        %v1789 = vpop.permute.xlu0 %1788
        %1790 = vrot.lane.b32.xlu0 %v1707, 125
        %v1791 = vpop.permute.xlu0 %1790
        %1792 = vrot.lane.b32.xlu0 %v1708, 125
        %v1793 = vpop.permute.xlu0 %1792
        %1794 = vrot.lane.b32.xlu0 %v1709, 125
        %v1795 = vpop.permute.xlu0 %1794
        %1796 = vrot.lane.b32.xlu0 %v1710, 125
        %v1797 = vpop.permute.xlu0 %1796
        %1798 = vrot.lane.b32.xlu0 %v1711, 125
        %v1799 = vpop.permute.xlu0 %1798
        %1800 = vrot.lane.b32.xlu0 %v1712, 125
        %v1801 = vpop.permute.xlu0 %1800
        %1802 = vrot.lane.b32.xlu0 %v1713, 125
        %v1803 = vpop.permute.xlu0 %1802
        %1804 = vrot.lane.b32.xlu0 %v1714, 125
        %v1805 = vpop.permute.xlu0 %1804
        %1806 = vrot.lane.b32.xlu0 %v1715, 125
        %v1807 = vpop.permute.xlu0 %1806
        %1808 = vrot.lane.b32.xlu0 %v1716, 125
        %v1809 = vpop.permute.xlu0 %1808
        %1810 = vrot.lane.b32.xlu0 %v1717, 125
        %v1811 = vpop.permute.xlu0 %1810
        %1812 = vrot.lane.b32.xlu0 %v1718, 125
        %v1813 = vpop.permute.xlu0 %1812
        %1814 = vrot.lane.b32.xlu0 %v1719, 125
        %v1815 = vpop.permute.xlu0 %1814
        %v1848 = vadd.f32 %v1492, %v1753
        %v1849 = vadd.f32 %v1493, %v1755
        %v1850 = vadd.f32 %v1494, %v1757
        %v1851 = vadd.f32 %v1495, %v1759
        %v1852 = vadd.f32 %v1496, %v1761
        %v1853 = vadd.f32 %v1497, %v1763
        %v1854 = vadd.f32 %v1498, %v1765
        %v1855 = vadd.f32 %v1499, %v1767
        %v1856 = vadd.f32 %v1500, %v1769
        %v1857 = vadd.f32 %v1501, %v1771
        %v1858 = vadd.f32 %v1502, %v1773
        %v1859 = vadd.f32 %v1503, %v1775
        %v1860 = vadd.f32 %v1504, %v1777
        %v1861 = vadd.f32 %v1505, %v1779
        %v1862 = vadd.f32 %v1506, %v1781
        %v1863 = vadd.f32 %v1507, %v1783
        %v1864 = vadd.f32 %v1508, %v1785
        %v1865 = vadd.f32 %v1509, %v1787
        %v1866 = vadd.f32 %v1510, %v1789
        %v1867 = vadd.f32 %v1511, %v1791
        %v1868 = vadd.f32 %v1512, %v1793
        %v1869 = vadd.f32 %v1513, %v1795
        %v1870 = vadd.f32 %v1514, %v1797
        %v1871 = vadd.f32 %v1515, %v1799
        %v1872 = vadd.f32 %v1516, %v1801
        %v1873 = vadd.f32 %v1517, %v1803
        %v1874 = vadd.f32 %v1518, %v1805
        %v1875 = vadd.f32 %v1519, %v1807
        %v1876 = vadd.f32 %v1520, %v1809
        %v1877 = vadd.f32 %v1521, %v1811
        %v1878 = vadd.f32 %v1522, %v1813
        %v1879 = vadd.f32 %v1523, %v1815
        %vm1880 = vcmask 7168
        %v1881 = vsel %vm1880, %v1848, 0.0
        %v1882 = vsel %vm1880, %v1850, 0.0
        %v1883 = vadd.f32 %v1881, %v1882
        %v1884 = vsel %vm1880, %v1852, 0.0
        %v1885 = vadd.f32 %v1883, %v1884
        %v1886 = vsel %vm1880, %v1854, 0.0
        %v1887 = vadd.f32 %v1885, %v1886
        %v1888 = vsel %vm1880, %v1856, 0.0
        %v1889 = vadd.f32 %v1887, %v1888
        %v1890 = vsel %vm1880, %v1858, 0.0
        %v1891 = vadd.f32 %v1889, %v1890
        %v1892 = vsel %vm1880, %v1860, 0.0
        %v1893 = vadd.f32 %v1891, %v1892
        %v1894 = vsel %vm1880, %v1862, 0.0
        %v1895 = vadd.f32 %v1893, %v1894
        %v1896 = vsel %vm1880, %v1864, 0.0
        %v1897 = vadd.f32 %v1895, %v1896
        %v1898 = vsel %vm1880, %v1866, 0.0
        %v1899 = vadd.f32 %v1897, %v1898
        %v1900 = vsel %vm1880, %v1868, 0.0
        %v1901 = vadd.f32 %v1899, %v1900
        %v1902 = vsel %vm1880, %v1870, 0.0
        %v1903 = vadd.f32 %v1901, %v1902
        %v1904 = vsel %vm1880, %v1872, 0.0
        %v1905 = vadd.f32 %v1903, %v1904
        %v1906 = vsel %vm1880, %v1874, 0.0
        %v1907 = vadd.f32 %v1905, %v1906
        %v1908 = vsel %vm1880, %v1876, 0.0
        %v1909 = vadd.f32 %v1907, %v1908
        %v1910 = vsel %vm1880, %v1878, 0.0
        %v1911 = vadd.f32 %v1909, %v1910
        %v1912 = vsel %vm1880, %v1849, 0.0
        %v1913 = vsel %vm1880, %v1851, 0.0
        %v1914 = vadd.f32 %v1912, %v1913
        %v1915 = vsel %vm1880, %v1853, 0.0
        %v1916 = vadd.f32 %v1914, %v1915
        %v1917 = vsel %vm1880, %v1855, 0.0
        %v1918 = vadd.f32 %v1916, %v1917
        %v1919 = vsel %vm1880, %v1857, 0.0
        %v1920 = vadd.f32 %v1918, %v1919
        %v1921 = vsel %vm1880, %v1859, 0.0
        %v1922 = vadd.f32 %v1920, %v1921
        %v1923 = vsel %vm1880, %v1861, 0.0
        %v1924 = vadd.f32 %v1922, %v1923
        %v1925 = vsel %vm1880, %v1863, 0.0
        %v1926 = vadd.f32 %v1924, %v1925
        %v1927 = vsel %vm1880, %v1865, 0.0
        %v1928 = vadd.f32 %v1926, %v1927
        %v1929 = vsel %vm1880, %v1867, 0.0
        %v1930 = vadd.f32 %v1928, %v1929
        %v1931 = vsel %vm1880, %v1869, 0.0
        %v1932 = vadd.f32 %v1930, %v1931
        %v1933 = vsel %vm1880, %v1871, 0.0
        %v1934 = vadd.f32 %v1932, %v1933
        %v1935 = vsel %vm1880, %v1873, 0.0
        %v1936 = vadd.f32 %v1934, %v1935
        %v1937 = vsel %vm1880, %v1875, 0.0
        %v1938 = vadd.f32 %v1936, %v1937
        %v1939 = vsel %vm1880, %v1877, 0.0
        %v1940 = vadd.f32 %v1938, %v1939
        %v1941 = vsel %vm1880, %v1879, 0.0
        %v1942 = vadd.f32 %v1940, %v1941
        %v1943 = vsel %vm1880, %v1911, 0.0
        %v1944 = vsel %vm1880, %v1942, 0.0
        %v1945 = vadd.f32 %v1943, %v1944
        %v1946 = vrot.slane %v1945, 4
        %v1947 = vadd.f32 %v1945, %v1946
        %v1948 = vrot.slane %v1947, 2
        %v1949 = vadd.f32 %v1947, %v1948
        %v1950 = vrot.slane %v1949, 1
        %v1951 = vadd.f32 %v1949, %v1950
        %v1952 = vadd.f32 %v1951, 0.0
        %1953 = vst.msk [vmem:[%s342] sm:$0x1] %vm613, %v1952
        %s1954 = scalar_lea.vmem [#allocation2], 16
        %s1955 = scalar_lea.vmem %s1954, 1 [#allocation2]
        %v1956 = vld [vmem:[%s1955] ss:$2 sm:$0x3f]
        %s1957 = scalar_lea.vmem %s1954, 33 [#allocation2]
        %v1958 = vld [vmem:[%s1957] ss:$2 sm:$0x3f]
        %s1959 = scalar_lea.vmem %s1954, 65 [#allocation2]
        %v1960 = vld [vmem:[%s1959] ss:$2 sm:$0x3f]
        %s1961 = scalar_lea.vmem %s1954, 97 [#allocation2]
        %v1962 = vld [vmem:[%s1961] ss:$2 sm:$0x3f]
        %s1963 = scalar_lea.vmem %s1954, 129 [#allocation2]
        %v1964 = vld [vmem:[%s1963] ss:$2 sm:$0x3f]
        %s1965 = scalar_lea.vmem %s1954, 161 [#allocation2]
        %v1966 = vld [vmem:[%s1965] ss:$2 sm:$0x3f]
        %s1967 = sld [smem:[#allocation3]]
        %v1968 = vstv %s1967
        %v1969 = vmul.f32 %v1968, %v1956
        %v1970 = vmul.f32 %v1968, %v1958
        %v1971 = vmul.f32 %v1968, %v1960
        %v1972 = vmul.f32 %v1968, %v1962
        %v1973 = vmul.f32 %v1968, %v1964
        %v1974 = vmul.f32 %v1968, %v1966
        %v1975 = vadd.f32 %v1969, 0.0
        %v1976 = vadd.f32 %v1970, 0.0
        %v1977 = vadd.f32 %v1971, 0.0
        %v1978 = vadd.f32 %v1972, 0.0
        %v1979 = vadd.f32 %v1973, 0.0
        %v1980 = vadd.f32 %v1974, 0.0
        %s1981 = scalar_lea.vmem %s1954, 2 [#allocation2]
        %v1982 = vld [vmem:[%s1981] ss:$2 sm:$0x3f]
        %s1983 = scalar_lea.vmem %s1954, 34 [#allocation2]
        %v1984 = vld [vmem:[%s1983] ss:$2 sm:$0x3f]
        %s1985 = scalar_lea.vmem %s1954, 66 [#allocation2]
        %v1986 = vld [vmem:[%s1985] ss:$2 sm:$0x3f]
        %s1987 = scalar_lea.vmem %s1954, 98 [#allocation2]
        %v1988 = vld [vmem:[%s1987] ss:$2 sm:$0x3f]
        %s1989 = scalar_lea.vmem %s1954, 130 [#allocation2]
        %v1990 = vld [vmem:[%s1989] ss:$2 sm:$0x3f]
        %s1991 = scalar_lea.vmem %s1954, 162 [#allocation2]
        %v1992 = vld [vmem:[%s1991] ss:$2 sm:$0x3f]
        %s1993 = sld [smem:[#allocation3 + $0x1]]
        %v1994 = vstv %s1993
        %v1995 = vmul.f32 %v1994, %v1982
        %v1996 = vmul.f32 %v1994, %v1984
        %v1997 = vmul.f32 %v1994, %v1986
        %v1998 = vmul.f32 %v1994, %v1988
        %v1999 = vmul.f32 %v1994, %v1990
        %v2000 = vmul.f32 %v1994, %v1992
        %v2001 = vadd.f32 %v1975, %v1995
        %v2002 = vadd.f32 %v1976, %v1996
        %v2003 = vadd.f32 %v1977, %v1997
        %v2004 = vadd.f32 %v1978, %v1998
        %v2005 = vadd.f32 %v1979, %v1999
        %v2006 = vadd.f32 %v1980, %v2000
        %s2007 = scalar_lea.vmem %s1954, 3 [#allocation2]
        %v2008 = vld [vmem:[%s2007] ss:$2 sm:$0x3f]
        %s2009 = scalar_lea.vmem %s1954, 35 [#allocation2]
        %v2010 = vld [vmem:[%s2009] ss:$2 sm:$0x3f]
        %s2011 = scalar_lea.vmem %s1954, 67 [#allocation2]
        %v2012 = vld [vmem:[%s2011] ss:$2 sm:$0x3f]
        %s2013 = scalar_lea.vmem %s1954, 99 [#allocation2]
        %v2014 = vld [vmem:[%s2013] ss:$2 sm:$0x3f]
        %s2015 = scalar_lea.vmem %s1954, 131 [#allocation2]
        %v2016 = vld [vmem:[%s2015] ss:$2 sm:$0x3f]
        %s2017 = scalar_lea.vmem %s1954, 163 [#allocation2]
        %v2018 = vld [vmem:[%s2017] ss:$2 sm:$0x3f]
        %s2019 = sld [smem:[#allocation3 + $0x2]]
        %v2020 = vstv %s2019
        %v2021 = vmul.f32 %v2020, %v2008
        %v2022 = vmul.f32 %v2020, %v2010
        %v2023 = vmul.f32 %v2020, %v2012
        %v2024 = vmul.f32 %v2020, %v2014
        %v2025 = vmul.f32 %v2020, %v2016
        %v2026 = vmul.f32 %v2020, %v2018
        %v2027 = vadd.f32 %v2001, %v2021
        %v2028 = vadd.f32 %v2002, %v2022
        %v2029 = vadd.f32 %v2003, %v2023
        %v2030 = vadd.f32 %v2004, %v2024
        %v2031 = vadd.f32 %v2005, %v2025
        %v2032 = vadd.f32 %v2006, %v2026
        %s2033 = scalar_lea.vmem [#allocation2], 32
        %s2034 = scalar_lea.vmem %s2033, 1 [#allocation2]
        %v2035 = vld [vmem:[%s2034] ss:$2 sm:$0x3f]
        %s2036 = scalar_lea.vmem %s2033, 33 [#allocation2]
        %v2037 = vld [vmem:[%s2036] ss:$2 sm:$0x3f]
        %s2038 = scalar_lea.vmem %s2033, 65 [#allocation2]
        %v2039 = vld [vmem:[%s2038] ss:$2 sm:$0x3f]
        %s2040 = scalar_lea.vmem %s2033, 97 [#allocation2]
        %v2041 = vld [vmem:[%s2040] ss:$2 sm:$0x3f]
        %s2042 = scalar_lea.vmem %s2033, 129 [#allocation2]
        %v2043 = vld [vmem:[%s2042] ss:$2 sm:$0x3f]
        %s2044 = scalar_lea.vmem %s2033, 161 [#allocation2]
        %v2045 = vld [vmem:[%s2044] ss:$2 sm:$0x3f]
        %s2046 = sld [smem:[#allocation3 + $0x80]]
        %v2047 = vstv %s2046
        %v2048 = vmul.f32 %v2047, %v2035
        %v2049 = vmul.f32 %v2047, %v2037
        %v2050 = vmul.f32 %v2047, %v2039
        %v2051 = vmul.f32 %v2047, %v2041
        %v2052 = vmul.f32 %v2047, %v2043
        %v2053 = vmul.f32 %v2047, %v2045
        %v2054 = vadd.f32 %v2027, %v2048
        %v2055 = vadd.f32 %v2028, %v2049
        %v2056 = vadd.f32 %v2029, %v2050
        %v2057 = vadd.f32 %v2030, %v2051
        %v2058 = vadd.f32 %v2031, %v2052
        %v2059 = vadd.f32 %v2032, %v2053
        %s2060 = scalar_lea.vmem %s2033, 2 [#allocation2]
        %v2061 = vld [vmem:[%s2060] ss:$2 sm:$0x3f]
        %s2062 = scalar_lea.vmem %s2033, 34 [#allocation2]
        %v2063 = vld [vmem:[%s2062] ss:$2 sm:$0x3f]
        %s2064 = scalar_lea.vmem %s2033, 66 [#allocation2]
        %v2065 = vld [vmem:[%s2064] ss:$2 sm:$0x3f]
        %s2066 = scalar_lea.vmem %s2033, 98 [#allocation2]
        %v2067 = vld [vmem:[%s2066] ss:$2 sm:$0x3f]
        %s2068 = scalar_lea.vmem %s2033, 130 [#allocation2]
        %v2069 = vld [vmem:[%s2068] ss:$2 sm:$0x3f]
        %s2070 = scalar_lea.vmem %s2033, 162 [#allocation2]
        %v2071 = vld [vmem:[%s2070] ss:$2 sm:$0x3f]
        %s2072 = sld [smem:[#allocation3 + $0x81]]
        %v2073 = vstv %s2072
        %v2074 = vmul.f32 %v2073, %v2061
        %v2075 = vmul.f32 %v2073, %v2063
        %v2076 = vmul.f32 %v2073, %v2065
        %v2077 = vmul.f32 %v2073, %v2067
        %v2078 = vmul.f32 %v2073, %v2069
        %v2079 = vmul.f32 %v2073, %v2071
        %v2080 = vadd.f32 %v2054, %v2074
        %v2081 = vadd.f32 %v2055, %v2075
        %v2082 = vadd.f32 %v2056, %v2076
        %v2083 = vadd.f32 %v2057, %v2077
        %v2084 = vadd.f32 %v2058, %v2078
        %v2085 = vadd.f32 %v2059, %v2079
        %s2086 = scalar_lea.vmem %s2033, 3 [#allocation2]
        %v2087 = vld [vmem:[%s2086] ss:$2 sm:$0x3f]
        %s2088 = scalar_lea.vmem %s2033, 35 [#allocation2]
        %v2089 = vld [vmem:[%s2088] ss:$2 sm:$0x3f]
        %s2090 = scalar_lea.vmem %s2033, 67 [#allocation2]
        %v2091 = vld [vmem:[%s2090] ss:$2 sm:$0x3f]
        %s2092 = scalar_lea.vmem %s2033, 99 [#allocation2]
        %v2093 = vld [vmem:[%s2092] ss:$2 sm:$0x3f]
        %s2094 = scalar_lea.vmem %s2033, 131 [#allocation2]
        %v2095 = vld [vmem:[%s2094] ss:$2 sm:$0x3f]
        %s2096 = scalar_lea.vmem %s2033, 163 [#allocation2]
        %v2097 = vld [vmem:[%s2096] ss:$2 sm:$0x3f]
        %s2098 = sld [smem:[#allocation3 + $0x82]]
        %v2099 = vstv %s2098
        %v2100 = vmul.f32 %v2099, %v2087
        %v2101 = vmul.f32 %v2099, %v2089
        %v2102 = vmul.f32 %v2099, %v2091
        %v2103 = vmul.f32 %v2099, %v2093
        %v2104 = vmul.f32 %v2099, %v2095
        %v2105 = vmul.f32 %v2099, %v2097
        %v2106 = vadd.f32 %v2080, %v2100
        %v2107 = vadd.f32 %v2081, %v2101
        %v2108 = vadd.f32 %v2082, %v2102
        %v2109 = vadd.f32 %v2083, %v2103
        %v2110 = vadd.f32 %v2084, %v2104
        %v2111 = vadd.f32 %v2085, %v2105
        %s2112 = scalar_lea.vmem [#allocation2], 48
        %s2113 = scalar_lea.vmem %s2112, 1 [#allocation2]
        %v2114 = vld [vmem:[%s2113] ss:$2 sm:$0x3f]
        %s2115 = scalar_lea.vmem %s2112, 33 [#allocation2]
        %v2116 = vld [vmem:[%s2115] ss:$2 sm:$0x3f]
        %s2117 = scalar_lea.vmem %s2112, 65 [#allocation2]
        %v2118 = vld [vmem:[%s2117] ss:$2 sm:$0x3f]
        %s2119 = scalar_lea.vmem %s2112, 97 [#allocation2]
        %v2120 = vld [vmem:[%s2119] ss:$2 sm:$0x3f]
        %s2121 = scalar_lea.vmem %s2112, 129 [#allocation2]
        %v2122 = vld [vmem:[%s2121] ss:$2 sm:$0x3f]
        %s2123 = scalar_lea.vmem %s2112, 161 [#allocation2]
        %v2124 = vld [vmem:[%s2123] ss:$2 sm:$0x3f]
        %s2125 = sld [smem:[#allocation3 + $0x100]]
        %v2126 = vstv %s2125
        %v2127 = vmul.f32 %v2126, %v2114
        %v2128 = vmul.f32 %v2126, %v2116
        %v2129 = vmul.f32 %v2126, %v2118
        %v2130 = vmul.f32 %v2126, %v2120
        %v2131 = vmul.f32 %v2126, %v2122
        %v2132 = vmul.f32 %v2126, %v2124
        %v2133 = vadd.f32 %v2106, %v2127
        %v2134 = vadd.f32 %v2107, %v2128
        %v2135 = vadd.f32 %v2108, %v2129
        %v2136 = vadd.f32 %v2109, %v2130
        %v2137 = vadd.f32 %v2110, %v2131
        %v2138 = vadd.f32 %v2111, %v2132
        %s2139 = scalar_lea.vmem %s2112, 2 [#allocation2]
        %v2140 = vld [vmem:[%s2139] ss:$2 sm:$0x3f]
        %s2141 = scalar_lea.vmem %s2112, 34 [#allocation2]
        %v2142 = vld [vmem:[%s2141] ss:$2 sm:$0x3f]
        %s2143 = scalar_lea.vmem %s2112, 66 [#allocation2]
        %v2144 = vld [vmem:[%s2143] ss:$2 sm:$0x3f]
        %s2145 = scalar_lea.vmem %s2112, 98 [#allocation2]
        %v2146 = vld [vmem:[%s2145] ss:$2 sm:$0x3f]
        %s2147 = scalar_lea.vmem %s2112, 130 [#allocation2]
        %v2148 = vld [vmem:[%s2147] ss:$2 sm:$0x3f]
        %s2149 = scalar_lea.vmem %s2112, 162 [#allocation2]
        %v2150 = vld [vmem:[%s2149] ss:$2 sm:$0x3f]
        %s2151 = sld [smem:[#allocation3 + $0x101]]
        %v2152 = vstv %s2151
        %v2153 = vmul.f32 %v2152, %v2140
        %v2154 = vmul.f32 %v2152, %v2142
        %v2155 = vmul.f32 %v2152, %v2144
        %v2156 = vmul.f32 %v2152, %v2146
        %v2157 = vmul.f32 %v2152, %v2148
        %v2158 = vmul.f32 %v2152, %v2150
        %v2159 = vadd.f32 %v2133, %v2153
        %v2160 = vadd.f32 %v2134, %v2154
        %v2161 = vadd.f32 %v2135, %v2155
        %v2162 = vadd.f32 %v2136, %v2156
        %v2163 = vadd.f32 %v2137, %v2157
        %v2164 = vadd.f32 %v2138, %v2158
        %s2165 = scalar_lea.vmem %s2112, 3 [#allocation2]
        %v2166 = vld [vmem:[%s2165] ss:$2 sm:$0x3f]
        %s2167 = scalar_lea.vmem %s2112, 35 [#allocation2]
        %v2168 = vld [vmem:[%s2167] ss:$2 sm:$0x3f]
        %s2169 = scalar_lea.vmem %s2112, 67 [#allocation2]
        %v2170 = vld [vmem:[%s2169] ss:$2 sm:$0x3f]
        %s2171 = scalar_lea.vmem %s2112, 99 [#allocation2]
        %v2172 = vld [vmem:[%s2171] ss:$2 sm:$0x3f]
        %s2173 = scalar_lea.vmem %s2112, 131 [#allocation2]
        %v2174 = vld [vmem:[%s2173] ss:$2 sm:$0x3f]
        %s2175 = scalar_lea.vmem %s2112, 163 [#allocation2]
        %v2176 = vld [vmem:[%s2175] ss:$2 sm:$0x3f]
        %s2177 = sld [smem:[#allocation3 + $0x102]]
        %v2178 = vstv %s2177
        %v2179 = vmul.f32 %v2178, %v2166
        %v2180 = vmul.f32 %v2178, %v2168
        %v2181 = vmul.f32 %v2178, %v2170
        %v2182 = vmul.f32 %v2178, %v2172
        %v2183 = vmul.f32 %v2178, %v2174
        %v2184 = vmul.f32 %v2178, %v2176
        %v2185 = vadd.f32 %v2159, %v2179
        %v2186 = vadd.f32 %v2160, %v2180
        %v2187 = vadd.f32 %v2161, %v2181
        %v2188 = vadd.f32 %v2162, %v2182
        %v2189 = vadd.f32 %v2163, %v2183
        %v2190 = vadd.f32 %v2164, %v2184
        %v2191 = vand.u32 2147483647, %v2185
        %v2192 = vand.u32 2147483647, %v2186
        %v2193 = vand.u32 2147483647, %v2187
        %v2194 = vand.u32 2147483647, %v2188
        %v2195 = vand.u32 2147483647, %v2189
        %v2196 = vand.u32 2147483647, %v2190
        %vm2197 = vcmask 62464
        %v2198 = vsel %vm2197, %v2191, 0.0
        %v2199 = vsel %vm2197, %v2192, 0.0
        %v2200 = vadd.f32 %v2198, %v2199
        %v2201 = vsel %vm2197, %v2193, 0.0
        %v2202 = vadd.f32 %v2200, %v2201
        %v2203 = vsel %vm2197, %v2194, 0.0
        %v2204 = vadd.f32 %v2202, %v2203
        %v2205 = vsel %vm2197, %v2195, 0.0
        %v2206 = vadd.f32 %v2204, %v2205
        %v2207 = vsel %vm2197, %v2196, 0.0
        %v2208 = vadd.f32 %v2206, %v2207
        %v2209 = vsel %vm2197, %v2208, 0.0
        %v2210 = vrot.slane %v2209, 4
        %v2211 = vadd.f32 %v2209, %v2210
        %v2212 = vrot.slane %v2211, 2
        %v2213 = vadd.f32 %v2211, %v2212
        %v2214 = vrot.slane %v2213, 1
        %v2215 = vadd.f32 %v2213, %v2214
        %v2216 = vsel %vm474, %v2215, 0.0
        %2217 = vadd.xlane.f32.xlu0 %v2216
        %v2218 = vpop.xlane.xlu0 %2217
        %2219 = vst.msk [vmem:[%s345] sm:$0x1] %vm613, %v2218
        %p2220 = scmp.lt.s32.totalorder %s20, 1
        %s2221 = scalar_select %p2220, %s20, 1
        %s2222 = scalar_lea.vmem %s5, %s2221
        %p2223 = scmp.lt.s32.totalorder %s20, 1
        %s2224 = scalar_select %p2223, %s20, 1
        %s2225 = scalar_lea.vmem %s6, %s2224
        %p2226 = scmp.lt.s32.totalorder %s20, 1
        %s2227 = scalar_select %p2226, %s20, 1
        %s2228 = scalar_lea.vmem %s7, %s2227
        // Predicated region
        $region45: #{myarc_loss.1} parent=39 // pred_check
          %p2229 = pneg %p158
        $region46: #{myarc_loss.1} parent=39 // pred_check_branch
          %2231 = sbr.rel (%p2229) target = $region48
        $region47: #{myarc_loss.1} parent=39 // pred_region
          _
        $region48: #{myarc_loss.1} parent=39 // pred_fallthru
          _
        // Predicated region
        $region49: #{myarc_loss.1} parent=39 // pred_check
          %p2232 = pneg %p184
        $region50: #{myarc_loss.1} parent=39 // pred_check_branch
          %2234 = sbr.rel (%p2232) target = $region52
        $region51: #{myarc_loss.1} parent=39 // pred_region
          _
        $region52: #{myarc_loss.1} parent=39 // pred_fallthru
          _
        // Predicated region
        $region53: #{myarc_loss.1} parent=39 // pred_check
          %p2235 = pneg %p210
        $region54: #{myarc_loss.1} parent=39 // pred_check_branch
          %2237 = sbr.rel (%p2235) target = $region56
        $region55: #{myarc_loss.1} parent=39 // pred_region
          _
        $region56: #{myarc_loss.1} parent=39 // pred_fallthru
          _
      $region40: #{myarc_loss.1} parent=5 // pred_fallthru
        _
      %p2238 = scmp.le.s32.totalorder 2, %s15
      // Predicated region
      $region57: #{myarc_loss.1} parent=5 // pred_check
        %p2239 = pneg %p2238
      $region58: #{myarc_loss.1} parent=5 // pred_check_branch
        %2241 = sbr.rel (%p2239) target = $region60
      $region59: #{myarc_loss.1} parent=5 // pred_region
        %s2242 = ssub.s32 %s15, 2
        // Predicated region
        $region61: #{myarc_loss.1} parent=59 // pred_check
          %p2243 = pneg %p164
        $region62: #{myarc_loss.1} parent=59 // pred_check_branch
          %2245 = sbr.rel (%p2243) target = $region64
        $region63: #{myarc_loss.1} parent=59 // pred_region
          %p2246 = scmp.lt.s32.totalorder %s21, 1
          %s2247 = scalar_select %p2246, %s21, 1
          %s2248 = scalar_lea.vmem %s5, %s2247
        $region64: #{myarc_loss.1} parent=59 // pred_fallthru
          _
        // Predicated region
        $region65: #{myarc_loss.1} parent=59 // pred_check
          %p2249 = pneg %p190
        $region66: #{myarc_loss.1} parent=59 // pred_check_branch
          %2251 = sbr.rel (%p2249) target = $region68
        $region67: #{myarc_loss.1} parent=59 // pred_region
          %p2252 = scmp.lt.s32.totalorder %s21, 1
          %s2253 = scalar_select %p2252, %s21, 1
          %s2254 = scalar_lea.vmem %s6, %s2253
        $region68: #{myarc_loss.1} parent=59 // pred_fallthru
          _
        // Predicated region
        $region69: #{myarc_loss.1} parent=59 // pred_check
          %p2255 = pneg %p216
        $region70: #{myarc_loss.1} parent=59 // pred_check_branch
          %2257 = sbr.rel (%p2255) target = $region72
        $region71: #{myarc_loss.1} parent=59 // pred_region
          %p2258 = scmp.lt.s32.totalorder %s21, 1
          %s2259 = scalar_select %p2258, %s21, 1
          %s2260 = scalar_lea.vmem %s7, %s2259
        $region72: #{myarc_loss.1} parent=59 // pred_fallthru
          _
      $region60: #{myarc_loss.1} parent=5 // pred_fallthru
        _
    $region6: #{myarc_loss.1} parent=1 // loop_footer
      %s19 = sadd.s32 1, %s15
    $region7: #{myarc_loss.1} parent=1 // loop_footer_branch
      %14 = sbr.rel target = $region3
    $region8: #{myarc_loss.1} parent=1 // loop_exit
      _
    %2261 = vsyncpa [#allocation4], 1
    %s2262 = scalar_lea.sflag [#allocation4], 1
    %2263 = vsyncpa %s2262, 1

</llo_original>
